<compile_context>
chip_gen: v7x
topology: tpu7x:2x2x1
jax: 0.10.0
libtpu: 0.0.40
codegen_flags: <defaults>
</compile_context>

<pallas_src>
import math
import functools

import jax
import jax.numpy as jnp
from jax.experimental import pallas as pl
from jax.experimental.pallas import tpu as pltpu


def _round_up(n, m):
    return ((n + m - 1) // m) * m


def _pick_b_block(batch, seq, target_rows=512):
    """Largest divisor of `batch` giving ~target_rows matmul rows per step,
    capped so that the grid has >= 2 steps when batch >= 2 (v7x has 2 TCs)."""
    want = max(1, target_rows // max(seq, 1))
    if batch >= 2:
        want = min(want, batch // 2)
    best = 1
    for d in range(1, batch + 1):
        if batch % d == 0 and d <= want:
            best = d
    return best


def _encoder_layer_kernel(x_ref, wqkv_ref, w1_ref, w2_ref, vec_ref, hmask_ref,
                          o_ref, *, d_model, eps, s_valid):
    """One grid step == one block of batch elements; weights resident in VMEM.
    Feature dim is zero-padded to a lane-dense multiple of 128 (Dp).  The
    correctness of the masked-gram attention relies on the invariant that every
    padded lane (>= d_model) of x / weights / biases is exactly zero."""
    xb = x_ref[...]                         # (B_blk, S_pad, Dp) f32, pads zero
    b_blk, seq, dp = xb.shape
    rows = b_blk * seq
    dffp = w1_ref.shape[1]

    x = xb.reshape(rows, dp)                # metadata-only: seq % 8 == 0
    x_bf = x.astype(jnp.bfloat16)

    vec = vec_ref[...]                      # (8, W) packed bias/LN vectors
    b_qkv = vec[0, :3 * dp]
    b1 = vec[1, :dffp]
    b2 = vec[2, :dp]
    ln1w, ln1b = vec[3, :dp], vec[4, :dp]
    ln2w, ln2b = vec[5, :dp], vec[6, :dp]

    # --- fused QKV projection (bf16 operands, f32 accumulation) --------------
    qkv = jnp.dot(x_bf, wqkv_ref[...],
                  preferred_element_type=jnp.float32) + b_qkv   # (rows, 3*Dp)
    q_bf = qkv[:, :dp].astype(jnp.bfloat16)     # scale pre-folded into Wq/bq
    k = qkv[:, dp:2 * dp]                       # f32
    v = qkv[:, 2 * dp:3 * dp]                   # f32

    # --- reassociated fourier attention: att = Q_scaled @ mask(K^T V) --------
    hmask = hmask_ref[...]                      # (Dp, Dp) block-diag head mask
    if s_valid < seq:                           # zero seq-pad rows out of gram
        seq_mask = jax.lax.broadcasted_iota(jnp.int32, (seq, dp), 0) < s_valid
    tn_dims = (((0,), (0,)), ((), ()))          # lhs-transposed: K^T @ V
    att_parts = []
    for bi in range(b_blk):                     # static unroll over batch block
        r0 = bi * seq
        kb = k[r0:r0 + seq, :]
        vb = v[r0:r0 + seq, :]
        if s_valid < seq:
            kb = jnp.where(seq_mask, kb, 0.0)
            vb = jnp.where(seq_mask, vb, 0.0)
        g = jax.lax.dot_general(kb, vb, tn_dims,
                                preferred_element_type=jnp.float32)  # (Dp, Dp)
        g = (g * hmask).astype(jnp.bfloat16)
        att_parts.append(jnp.dot(q_bf[r0:r0 + seq, :], g,
                                 preferred_element_type=jnp.float32))
    att = att_parts[0] if b_blk == 1 else jnp.concatenate(att_parts, axis=0)

    # --- masked LayerNorm (stats over the real d_model features only) --------
    feat_mask = jax.lax.broadcasted_iota(jnp.int32, (rows, dp), 1) < d_model
    inv_d = 1.0 / d_model

    def masked_ln(h, gamma, beta):
        hm = jnp.where(feat_mask, h, 0.0)
        mean = jnp.sum(hm, axis=-1, keepdims=True) * inv_d
        diff = jnp.where(feat_mask, h - mean, 0.0)
        var = jnp.sum(diff * diff, axis=-1, keepdims=True) * inv_d
        # padded gamma/beta lanes are zero -> padded output lanes stay zero
        return diff * jax.lax.rsqrt(var + eps) * gamma + beta

    h1n = masked_ln(x + att, ln1w, ln1b)

    # --- FeedForward + residual + LayerNorm2 (bf16 matmul operands) ----------
    f = jnp.dot(h1n.astype(jnp.bfloat16), w1_ref[...],
                preferred_element_type=jnp.float32) + b1
    f = jnp.maximum(f, 0.0)
    f = jnp.dot(f.astype(jnp.bfloat16), w2_ref[...],
                preferred_element_type=jnp.float32) + b2
    out = masked_ln(h1n + f, ln2w, ln2b)

    o_ref[...] = out.reshape(b_blk, seq, dp).astype(o_ref.dtype)


def simple_transformer_encoder_layer(x, params, *, n_head, eps=1e-5):
    """x: (B, S, D) float32. params: dict of pre-transposed (in,out) weights."""
    B, S, D = x.shape
    d_k = D // n_head
    Dp = _round_up(D, 128)                   # lane-dense feature width
    dff = params["w1"].shape[1]
    dffp = _round_up(dff, 128)
    Sp = _round_up(S, 8)                     # sublane-aligned seq
    scale = 1.0 / (math.sqrt(d_k) * S)       # fourier attn scale (orig seq len)

    f32 = jnp.float32

    # --- fused QKV weight (scale folded into Q columns), bf16 ----------------
    wqkv = jnp.zeros((Dp, 3 * Dp), f32)
    wqkv = wqkv.at[:D, 0:D].set(params["wq"] * scale)
    wqkv = wqkv.at[:D, Dp:Dp + D].set(params["wk"])
    wqkv = wqkv.at[:D, 2 * Dp:2 * Dp + D].set(params["wv"])
    wqkv = wqkv.astype(jnp.bfloat16)

    w1p = jnp.zeros((Dp, dffp), f32).at[:D, :dff].set(params["w1"]).astype(jnp.bfloat16)
    w2p = jnp.zeros((dffp, Dp), f32).at[:dff, :D].set(params["w2"]).astype(jnp.bfloat16)

    # --- packed bias / LayerNorm vectors (one array, one DMA) ----------------
    W = max(3 * Dp, dffp)
    vec = jnp.zeros((8, W), f32)
    vec = vec.at[0, 0:D].set(params["bq"][0] * scale)
    vec = vec.at[0, Dp:Dp + D].set(params["bk"][0])
    vec = vec.at[0, 2 * Dp:2 * Dp + D].set(params["bv"][0])
    vec = vec.at[1, :dff].set(params["b1"][0])
    vec = vec.at[2, :D].set(params["b2"][0])
    vec = vec.at[3, :D].set(params["ln1_w"][0])
    vec = vec.at[4, :D].set(params["ln1_b"][0])
    vec = vec.at[5, :D].set(params["ln2_w"][0])
    vec = vec.at[6, :D].set(params["ln2_b"][0])

    # --- block-diagonal head mask for the gram --------------------------------
    idx = jnp.arange(Dp)
    valid = idx < D
    blk = idx // d_k
    hmask = ((blk[:, None] == blk[None, :]) &
             valid[:, None] & valid[None, :]).astype(f32)

    # --- padded input ----------------------------------------------------------
    xp = jnp.pad(x, ((0, 0), (0, Sp - S), (0, Dp - D)))

    b_blk = _pick_b_block(B, Sp)
    grid = (B // b_blk,)

    kernel = functools.partial(_encoder_layer_kernel,
                               d_model=D, eps=eps, s_valid=S)

    full = lambda arr: pl.BlockSpec(arr.shape, lambda b: (0,) * arr.ndim)
    weights = (wqkv, w1p, w2p, vec, hmask)

    out_p = pl.pallas_call(
        kernel,
        out_shape=jax.ShapeDtypeStruct((B, Sp, Dp), jnp.float32),
        grid_spec=pltpu.PrefetchScalarGridSpec(
            num_scalar_prefetch=0,
            grid=grid,
            in_specs=[pl.BlockSpec((b_blk, Sp, Dp), lambda b: (b, 0, 0))]
                     + [full(w) for w in weights],
            out_specs=pl.BlockSpec((b_blk, Sp, Dp), lambda b: (b, 0, 0)),
        ),
        compiler_params=pltpu.CompilerParams(
            dimension_semantics=("parallel",)),
    )(xp, *weights)

    # TODO(synk): when stacking layers, keep the padded (Sp, Dp) layout and
    # slice only once at the very end to avoid per-layer HBM re-traffic.
    return out_p[:, :S, :D]


def _reference(x, params, *, n_head, eps=1e-5):
    """Pure-JAX f32 reference of the PyTorch forward (eval mode, pos=None)."""
    B, S, D = x.shape
    d_k = D // n_head
    q = x @ params["wq"] + params["bq"]
    k = x @ params["wk"] + params["bk"]
    v = x @ params["wv"] + params["bv"]
    split = lambda t: t.reshape(B, S, n_head, d_k).transpose(0, 2, 1, 3)
    qh, kh, vh = split(q), split(k), split(v)
    scores = jnp.einsum("bhqd,bhkd->bhqk", qh, kh) / math.sqrt(d_k)
    p_attn = scores / S                   # fourier attention (no softmax)
    att = jnp.einsum("bhqk,bhkd->bhqd", p_attn, vh)
    att = att.transpose(0, 2, 1, 3).reshape(B, S, D)

    def ln(h, g, b):
        mean = h.mean(-1, keepdims=True)
        var = ((h - mean) ** 2).mean(-1, keepdims=True)
        return (h - mean) / jnp.sqrt(var + eps) * g + b

    h1 = ln(x + att, params["ln1_w"], params["ln1_b"])
    f = jnp.maximum(h1 @ params["w1"] + params["b1"], 0.0)
    f = f @ params["w2"] + params["b2"]
    return ln(h1 + f, params["ln2_w"], params["ln2_b"])


def _init_params(key, d_model, dff):
    """Deterministic synthetic parameters (shapes per the module __init__).
    Linear weights stored pre-transposed as (in, out); biases/LN params (1, out)."""
    ks = jax.random.split(key, 14)
    s = 0.05
    return {
        "wq": jax.random.normal(ks[0], (d_model, d_model), jnp.float32) * s,
        "bq": jax.random.normal(ks[1], (1, d_model), jnp.float32) * s,
        "wk": jax.random.normal(ks[2], (d_model, d_model), jnp.float32) * s,
        "bk": jax.random.normal(ks[3], (1, d_model), jnp.float32) * s,
        "wv": jax.random.normal(ks[4], (d_model, d_model), jnp.float32) * s,
        "bv": jax.random.normal(ks[5], (1, d_model), jnp.float32) * s,
        "ln1_w": 1.0 + jax.random.normal(ks[6], (1, d_model), jnp.float32) * 0.1,
        "ln1_b": jax.random.normal(ks[7], (1, d_model), jnp.float32) * 0.05,
        "w1": jax.random.normal(ks[8], (d_model, dff), jnp.float32) * s,
        "b1": jax.random.normal(ks[9], (1, dff), jnp.float32) * s,
        "w2": jax.random.normal(ks[10], (dff, d_model), jnp.float32) * s,
        "b2": jax.random.normal(ks[11], (1, d_model), jnp.float32) * s,
        "ln2_w": 1.0 + jax.random.normal(ks[12], (1, d_model), jnp.float32) * 0.1,
        "ln2_b": jax.random.normal(ks[13], (1, d_model), jnp.float32) * 0.05,
    }


if __name__ == "__main__":
    # Module defaults: d_model=96, n_head=2, dim_feedforward=512. Small B/S.
    B, S, d_model, n_head, dff = 2, 8, 96, 2, 512

    key = jax.random.PRNGKey(0)
    kx, kp = jax.random.split(key)
    x = jax.random.normal(kx, (B, S, d_model), jnp.float32)
    params = _init_params(kp, d_model, dff)

    out = simple_transformer_encoder_layer(x, params, n_head=n_head)
    out = jax.block_until_ready(out)

    ref = _reference(x, params, n_head=n_head)
    assert out.shape == (B, S, d_model)
    # Tolerance loosened vs v2: matmul operands are bf16 (f32 accumulation),
    # compared against a pure-f32 reference.
    err = float(jnp.max(jnp.abs(out - ref)))
    assert jnp.allclose(out, ref, atol=2e-2, rtol=2e-2), err

    print("KERNEL_OK")
</pallas_src>

<mosaic_0001>
module attributes {stable_mosaic.version = 11 : i64} {
  func.func @_encoder_layer_kernel(%arg0: i32, %arg1: memref<1x8x128xf32, #tpu.memory_space<vmem>>, %arg2: memref<128x384xbf16, #tpu.memory_space<vmem>>, %arg3: memref<128x512xbf16, #tpu.memory_space<vmem>>, %arg4: memref<512x128xbf16, #tpu.memory_space<vmem>>, %arg5: memref<8x512xf32, #tpu.memory_space<vmem>>, %arg6: memref<128x128xf32, #tpu.memory_space<vmem>>, %arg7: memref<1x8x128xf32, #tpu.memory_space<vmem>>) attributes {dimension_semantics = [#tpu.dimension_semantics<parallel>], iteration_bounds = array<i64: 2>, scalar_prefetch = 0 : i64, scratch_operands = 0 : i64, tpu.core_type = #tpu.core_type<tc>, window_params = [{transform_indices = @transform_0, window_bounds = array<i64: 1, 8, 128>}, {pipeline_mode = #tpu.pipeline_mode<synchronous>, transform_indices = @transform_1, window_bounds = array<i64: 128, 384>}, {pipeline_mode = #tpu.pipeline_mode<synchronous>, transform_indices = @transform_2, window_bounds = array<i64: 128, 512>}, {pipeline_mode = #tpu.pipeline_mode<synchronous>, transform_indices = @transform_3, window_bounds = array<i64: 512, 128>}, {pipeline_mode = #tpu.pipeline_mode<synchronous>, transform_indices = @transform_4, window_bounds = array<i64: 8, 512>}, {pipeline_mode = #tpu.pipeline_mode<synchronous>, transform_indices = @transform_5, window_bounds = array<i64: 128, 128>}, {transform_indices = @transform_6, window_bounds = array<i64: 1, 8, 128>}]} {
    %c0 = arith.constant 0 : index
    %c0_0 = arith.constant 0 : index
    %c0_1 = arith.constant 0 : index
    %0 = vector.load %arg1[%c0, %c0_0, %c0_1] : memref<1x8x128xf32, #tpu.memory_space<vmem>>, vector<1x8x128xf32>
    %1 = vector.shape_cast %0 : vector<1x8x128xf32> to vector<8x128xf32>
    %2 = arith.truncf %1 : vector<8x128xf32> to vector<8x128xbf16>
    %c0_2 = arith.constant 0 : index
    %c0_3 = arith.constant 0 : index
    %3 = vector.load %arg5[%c0_2, %c0_3] : memref<8x512xf32, #tpu.memory_space<vmem>>, vector<8x512xf32>
    %4 = vector.extract_strided_slice %3 {offsets = [0, 0], sizes = [1, 384], strides = [1, 1]} : vector<8x512xf32> to vector<1x384xf32>
    %5 = vector.shape_cast %4 : vector<1x384xf32> to vector<384xf32>
    %6 = vector.extract_strided_slice %3 {offsets = [1, 0], sizes = [1, 512], strides = [1, 1]} : vector<8x512xf32> to vector<1x512xf32>
    %7 = vector.shape_cast %6 : vector<1x512xf32> to vector<512xf32>
    %8 = vector.extract_strided_slice %3 {offsets = [2, 0], sizes = [1, 128], strides = [1, 1]} : vector<8x512xf32> to vector<1x128xf32>
    %9 = vector.shape_cast %8 : vector<1x128xf32> to vector<128xf32>
    %10 = vector.extract_strided_slice %3 {offsets = [3, 0], sizes = [1, 128], strides = [1, 1]} : vector<8x512xf32> to vector<1x128xf32>
    %11 = vector.shape_cast %10 : vector<1x128xf32> to vector<128xf32>
    %12 = vector.extract_strided_slice %3 {offsets = [4, 0], sizes = [1, 128], strides = [1, 1]} : vector<8x512xf32> to vector<1x128xf32>
    %13 = vector.shape_cast %12 : vector<1x128xf32> to vector<128xf32>
    %14 = vector.extract_strided_slice %3 {offsets = [5, 0], sizes = [1, 128], strides = [1, 1]} : vector<8x512xf32> to vector<1x128xf32>
    %15 = vector.shape_cast %14 : vector<1x128xf32> to vector<128xf32>
    %16 = vector.extract_strided_slice %3 {offsets = [6, 0], sizes = [1, 128], strides = [1, 1]} : vector<8x512xf32> to vector<1x128xf32>
    %17 = vector.shape_cast %16 : vector<1x128xf32> to vector<128xf32>
    %c0_4 = arith.constant 0 : index
    %c0_5 = arith.constant 0 : index
    %18 = vector.load %arg2[%c0_4, %c0_5] : memref<128x384xbf16, #tpu.memory_space<vmem>>, vector<128x384xbf16>
    %cst = arith.constant dense<0.000000e+00> : vector<8x384xf32>
    %19 = tpu.matmul %2, %18, %cst {dimension_numbers = #tpu.dot_dimension_numbers<[1], [0], [0], [1], [0, 0, 1, 1], [], []>} : vector<8x128xbf16>, vector<128x384xbf16>, vector<8x384xf32> -> vector<8x384xf32>
    %20 = vector.shape_cast %5 : vector<384xf32> to vector<1x384xf32>
    %21 = vector.broadcast %20 : vector<1x384xf32> to vector<8x384xf32>
    %22 = arith.addf %19, %21 : vector<8x384xf32>
    %23 = vector.extract_strided_slice %22 {offsets = [0, 0], sizes = [8, 128], strides = [1, 1]} : vector<8x384xf32> to vector<8x128xf32>
    %24 = arith.truncf %23 : vector<8x128xf32> to vector<8x128xbf16>
    %25 = vector.extract_strided_slice %22 {offsets = [0, 128], sizes = [8, 128], strides = [1, 1]} : vector<8x384xf32> to vector<8x128xf32>
    %26 = vector.extract_strided_slice %22 {offsets = [0, 256], sizes = [8, 128], strides = [1, 1]} : vector<8x384xf32> to vector<8x128xf32>
    %c0_6 = arith.constant 0 : index
    %c0_7 = arith.constant 0 : index
    %27 = vector.load %arg6[%c0_6, %c0_7] : memref<128x128xf32, #tpu.memory_space<vmem>>, vector<128x128xf32>
    %cst_8 = arith.constant dense<0.000000e+00> : vector<128x128xf32>
    %28 = tpu.matmul %25, %26, %cst_8 {dimension_numbers = #tpu.dot_dimension_numbers<[0], [0], [1], [1], [0, 1, 1, 1], [], []>} : vector<8x128xf32>, vector<8x128xf32>, vector<128x128xf32> -> vector<128x128xf32>
    %29 = arith.mulf %28, %27 : vector<128x128xf32>
    %30 = arith.truncf %29 : vector<128x128xf32> to vector<128x128xbf16>
    %cst_9 = arith.constant dense<0.000000e+00> : vector<8x128xf32>
    %31 = tpu.matmul %24, %30, %cst_9 {dimension_numbers = #tpu.dot_dimension_numbers<[1], [0], [0], [1], [0, 0, 1, 1], [], []>} : vector<8x128xbf16>, vector<128x128xbf16>, vector<8x128xf32> -> vector<8x128xf32>
    %32 = tpu.iota {dimensions = array<i32: 1>} : vector<8x128xi32>
    %c96_i32 = arith.constant 96 : i32
    %33 = vector.broadcast %c96_i32 : i32 to vector<8x128xi32>
    %34 = arith.cmpi slt, %32, %33 : vector<8x128xi32>
    %35 = arith.addf %1, %31 : vector<8x128xf32>
    %cst_10 = arith.constant 0.000000e+00 : f32
    %36 = vector.broadcast %cst_10 : f32 to vector<8x128xf32>
    %37 = arith.select %34, %35, %36 : vector<8x128xi1>, vector<8x128xf32>
    %cst_11 = arith.constant dense<0.000000e+00> : vector<8xf32>
    %38 = vector.multi_reduction <add>, %37, %cst_11 [1] : vector<8x128xf32> to vector<8xf32>
    %39 = vector.shape_cast %38 : vector<8xf32> to vector<8x1xf32>
    %cst_12 = arith.constant 0.010416667 : f32
    %40 = vector.broadcast %cst_12 : f32 to vector<8x1xf32>
    %41 = arith.mulf %39, %40 : vector<8x1xf32>
    %42 = vector.broadcast %41 : vector<8x1xf32> to vector<8x128xf32>
    %43 = arith.subf %35, %42 : vector<8x128xf32>
    %cst_13 = arith.constant 0.000000e+00 : f32
    %44 = vector.broadcast %cst_13 : f32 to vector<8x128xf32>
    %45 = arith.select %34, %43, %44 : vector<8x128xi1>, vector<8x128xf32>
    %46 = arith.mulf %45, %45 : vector<8x128xf32>
    %cst_14 = arith.constant dense<0.000000e+00> : vector<8xf32>
    %47 = vector.multi_reduction <add>, %46, %cst_14 [1] : vector<8x128xf32> to vector<8xf32>
    %48 = vector.shape_cast %47 : vector<8xf32> to vector<8x1xf32>
    %cst_15 = arith.constant 0.010416667 : f32
    %49 = vector.broadcast %cst_15 : f32 to vector<8x1xf32>
    %50 = arith.mulf %48, %49 : vector<8x1xf32>
    %cst_16 = arith.constant 9.99999974E-6 : f32
    %51 = vector.broadcast %cst_16 : f32 to vector<8x1xf32>
    %52 = arith.addf %50, %51 : vector<8x1xf32>
    %53 = math.rsqrt %52 : vector<8x1xf32>
    %54 = vector.broadcast %53 : vector<8x1xf32> to vector<8x128xf32>
    %55 = arith.mulf %45, %54 : vector<8x128xf32>
    %56 = vector.shape_cast %11 : vector<128xf32> to vector<1x128xf32>
    %57 = vector.broadcast %56 : vector<1x128xf32> to vector<8x128xf32>
    %58 = arith.mulf %55, %57 : vector<8x128xf32>
    %59 = vector.shape_cast %13 : vector<128xf32> to vector<1x128xf32>
    %60 = vector.broadcast %59 : vector<1x128xf32> to vector<8x128xf32>
    %61 = arith.addf %58, %60 : vector<8x128xf32>
    %62 = arith.truncf %61 : vector<8x128xf32> to vector<8x128xbf16>
    %c0_17 = arith.constant 0 : index
    %c0_18 = arith.constant 0 : index
    %63 = vector.load %arg3[%c0_17, %c0_18] : memref<128x512xbf16, #tpu.memory_space<vmem>>, vector<128x512xbf16>
    %cst_19 = arith.constant dense<0.000000e+00> : vector<8x512xf32>
    %64 = tpu.matmul %62, %63, %cst_19 {dimension_numbers = #tpu.dot_dimension_numbers<[1], [0], [0], [1], [0, 0, 1, 1], [], []>} : vector<8x128xbf16>, vector<128x512xbf16>, vector<8x512xf32> -> vector<8x512xf32>
    %65 = vector.shape_cast %7 : vector<512xf32> to vector<1x512xf32>
    %66 = vector.broadcast %65 : vector<1x512xf32> to vector<8x512xf32>
    %67 = arith.addf %64, %66 : vector<8x512xf32>
    %cst_20 = arith.constant 0.000000e+00 : f32
    %68 = vector.broadcast %cst_20 : f32 to vector<8x512xf32>
    %69 = arith.maximumf %67, %68 : vector<8x512xf32>
    %70 = arith.truncf %69 : vector<8x512xf32> to vector<8x512xbf16>
    %c0_21 = arith.constant 0 : index
    %c0_22 = arith.constant 0 : index
    %71 = vector.load %arg4[%c0_21, %c0_22] : memref<512x128xbf16, #tpu.memory_space<vmem>>, vector<512x128xbf16>
    %cst_23 = arith.constant dense<0.000000e+00> : vector<8x128xf32>
    %72 = tpu.matmul %70, %71, %cst_23 {dimension_numbers = #tpu.dot_dimension_numbers<[1], [0], [0], [1], [0, 0, 1, 1], [], []>} : vector<8x512xbf16>, vector<512x128xbf16>, vector<8x128xf32> -> vector<8x128xf32>
    %73 = vector.shape_cast %9 : vector<128xf32> to vector<1x128xf32>
    %74 = vector.broadcast %73 : vector<1x128xf32> to vector<8x128xf32>
    %75 = arith.addf %72, %74 : vector<8x128xf32>
    %76 = arith.addf %61, %75 : vector<8x128xf32>
    %cst_24 = arith.constant 0.000000e+00 : f32
    %77 = vector.broadcast %cst_24 : f32 to vector<8x128xf32>
    %78 = arith.select %34, %76, %77 : vector<8x128xi1>, vector<8x128xf32>
    %cst_25 = arith.constant dense<0.000000e+00> : vector<8xf32>
    %79 = vector.multi_reduction <add>, %78, %cst_25 [1] : vector<8x128xf32> to vector<8xf32>
    %80 = vector.shape_cast %79 : vector<8xf32> to vector<8x1xf32>
    %cst_26 = arith.constant 0.010416667 : f32
    %81 = vector.broadcast %cst_26 : f32 to vector<8x1xf32>
    %82 = arith.mulf %80, %81 : vector<8x1xf32>
    %83 = vector.broadcast %82 : vector<8x1xf32> to vector<8x128xf32>
    %84 = arith.subf %76, %83 : vector<8x128xf32>
    %cst_27 = arith.constant 0.000000e+00 : f32
    %85 = vector.broadcast %cst_27 : f32 to vector<8x128xf32>
    %86 = arith.select %34, %84, %85 : vector<8x128xi1>, vector<8x128xf32>
    %87 = arith.mulf %86, %86 : vector<8x128xf32>
    %cst_28 = arith.constant dense<0.000000e+00> : vector<8xf32>
    %88 = vector.multi_reduction <add>, %87, %cst_28 [1] : vector<8x128xf32> to vector<8xf32>
    %89 = vector.shape_cast %88 : vector<8xf32> to vector<8x1xf32>
    %cst_29 = arith.constant 0.010416667 : f32
    %90 = vector.broadcast %cst_29 : f32 to vector<8x1xf32>
    %91 = arith.mulf %89, %90 : vector<8x1xf32>
    %cst_30 = arith.constant 9.99999974E-6 : f32
    %92 = vector.broadcast %cst_30 : f32 to vector<8x1xf32>
    %93 = arith.addf %91, %92 : vector<8x1xf32>
    %94 = math.rsqrt %93 : vector<8x1xf32>
    %95 = vector.broadcast %94 : vector<8x1xf32> to vector<8x128xf32>
    %96 = arith.mulf %86, %95 : vector<8x128xf32>
    %97 = vector.shape_cast %15 : vector<128xf32> to vector<1x128xf32>
    %98 = vector.broadcast %97 : vector<1x128xf32> to vector<8x128xf32>
    %99 = arith.mulf %96, %98 : vector<8x128xf32>
    %100 = vector.shape_cast %17 : vector<128xf32> to vector<1x128xf32>
    %101 = vector.broadcast %100 : vector<1x128xf32> to vector<8x128xf32>
    %102 = arith.addf %99, %101 : vector<8x128xf32>
    %103 = vector.shape_cast %102 : vector<8x128xf32> to vector<1x8x128xf32>
    %c0_31 = arith.constant 0 : index
    %c0_32 = arith.constant 0 : index
    %c0_33 = arith.constant 0 : index
    %104 = vector.load %arg7[%c0_31, %c0_32, %c0_33] : memref<1x8x128xf32, #tpu.memory_space<vmem>>, vector<1x8x128xf32>
    tpu.vector_store %arg7[%c0_31, %c0_32, %c0_33], %103 {strides = array<i32>} : memref<1x8x128xf32, #tpu.memory_space<vmem>>, vector<1x8x128xf32>,
    return
  }
  func.func @transform_0(%arg0: i32) -> (i32, i32, i32) {
    %c0_i32 = arith.constant 0 : i32
    %c0_i32_0 = arith.constant 0 : i32
    %c0_i32_1 = arith.constant 0 : i32
    return %arg0, %c0_i32, %c0_i32_0 : i32, i32, i32
  }
  func.func @transform_1(%arg0: i32) -> (i32, i32) {
    %c0_i32 = arith.constant 0 : i32
    %c0_i32_0 = arith.constant 0 : i32
    %c0_i32_1 = arith.constant 0 : i32
    return %c0_i32, %c0_i32_0 : i32, i32
  }
  func.func @transform_2(%arg0: i32) -> (i32, i32) {
    %c0_i32 = arith.constant 0 : i32
    %c0_i32_0 = arith.constant 0 : i32
    %c0_i32_1 = arith.constant 0 : i32
    return %c0_i32, %c0_i32_0 : i32, i32
  }
  func.func @transform_3(%arg0: i32) -> (i32, i32) {
    %c0_i32 = arith.constant 0 : i32
    %c0_i32_0 = arith.constant 0 : i32
    %c0_i32_1 = arith.constant 0 : i32
    return %c0_i32, %c0_i32_0 : i32, i32
  }
  func.func @transform_4(%arg0: i32) -> (i32, i32) {
    %c0_i32 = arith.constant 0 : i32
    %c0_i32_0 = arith.constant 0 : i32
    %c0_i32_1 = arith.constant 0 : i32
    return %c0_i32, %c0_i32_0 : i32, i32
  }
  func.func @transform_5(%arg0: i32) -> (i32, i32) {
    %c0_i32 = arith.constant 0 : i32
    %c0_i32_0 = arith.constant 0 : i32
    %c0_i32_1 = arith.constant 0 : i32
    return %c0_i32, %c0_i32_0 : i32, i32
  }
  func.func @transform_6(%arg0: i32) -> (i32, i32, i32) {
    %c0_i32 = arith.constant 0 : i32
    %c0_i32_0 = arith.constant 0 : i32
    %c0_i32_1 = arith.constant 0 : i32
    return %arg0, %c0_i32, %c0_i32_0 : i32, i32, i32
  }
}

</mosaic_0001>

<llo_original>
// kernel: tpu_custom_call.1
$region0: #{tpu_custom_call.1}
  #allocation0 [shape = 'u32[]', space=smem, size = 0x4, offset = 0x4, fixed_abs, tag = 'smem constant byte address 0x4 - core index']
  #allocation1 [shape = 'u32[144,128]{1,0:T(1,128)}', space=vmem, size = 0x12000, scoped, tag = 'internal scratch']
  %s0 = inlined_call_operand.hbm [shape: f32[2,8,128], index: 0, kind: input, shape index: {}]
  %s1 = inlined_call_operand.hbm [shape: bf16[128,384], index: 1, kind: input, shape index: {}]
  %s2 = inlined_call_operand.hbm [shape: bf16[128,512], index: 2, kind: input, shape index: {}]
  %s3 = inlined_call_operand.hbm [shape: bf16[512,128], index: 3, kind: input, shape index: {}]
  %s4 = inlined_call_operand.hbm [shape: f32[8,512], index: 4, kind: input, shape index: {}]
  %s5 = inlined_call_operand.hbm [shape: f32[128,128], index: 5, kind: input, shape index: {}]
  %s6 = inlined_call_operand.hbm [shape: f32[2,8,128], index: 6, kind: output, shape index: {}]
  %s7 = sld [smem:[#allocation0]]
  $region81: #{tpu_custom_call.1} parent=0
    _
  %s9 = ssub.s32 1, %s7
  %s10 = scalar_select 0, %s9, %s7
  $region1: #{tpu_custom_call.1} parent=0
    #allocation2 [shape = 'u8[8192]{0}', space=vmem, size = 0x2000, scoped, tag = 'input window, operand 0']
    #allocation3 [shape = 's32[2]{0}', space=sflag, size = 0x8, scoped, tag = 'scoped memory for tpu_custom_call.1']
    #allocation4 [shape = 's32[2]{0}', space=sflag, size = 0x8, scoped, tag = 'scoped memory for tpu_custom_call.1']
    #allocation5 [shape = 'u8[98304]{0}', space=vmem, size = 0x18000, scoped, tag = 'input window, operand 1, single buffered']
    #allocation6 [shape = 's32[1]{0}', space=sflag, size = 0x4, scoped, tag = 'scoped memory for tpu_custom_call.1']
    #allocation7 [shape = 'u8[131072]{0}', space=vmem, size = 0x20000, scoped, tag = 'input window, operand 2, single buffered']
    #allocation8 [shape = 'u8[131072]{0}', space=vmem, size = 0x20000, scoped, tag = 'input window, operand 3, single buffered']
    #allocation9 [shape = 's32[1]{0}', space=sflag, size = 0x4, scoped, tag = 'scoped memory for tpu_custom_call.1']
    #allocation10 [shape = 'u8[16384]{0}', space=vmem, size = 0x4000, scoped, tag = 'input window, operand 4, single buffered']
    #allocation11 [shape = 'u8[65536]{0}', space=vmem, size = 0x10000, scoped, tag = 'input window, operand 5, single buffered']
    #allocation12 [shape = 's32[1]{0}', space=sflag, size = 0x4, scoped, tag = 'scoped memory for tpu_custom_call.1']
    #allocation13 [shape = 'u8[8192]{0}', space=vmem, size = 0x2000, scoped, tag = 'output window, operand 0']
    %11 = vsyncpa [#allocation3], 0
    %s12 = scalar_lea.sflag [#allocation3], 1
    %13 = vsyncpa %s12, 0
    %14 = vsyncpa [#allocation6], 0
    %15 = vsyncpa [#allocation9], 0
    %16 = vsyncpa [#allocation12], 0
    %17 = vsyncpa [#allocation4], 0
    %s18 = scalar_lea.sflag [#allocation4], 1
    %19 = vsyncpa %s18, 0
    loop: start=0, step=1, limit=4
    $region2: #{tpu_custom_call.1} parent=1 // loop_pre_header
      _
    $region3: #{tpu_custom_call.1} parent=1 // loop_header
      %s21 = sphi 0, %s25
      %p22 = scmp.ge.s32.totalorder %s21, 4
      %s31 = sphi 0, %s33
      %s34 = sphi 0, %s31
      %s35 = sphi 0, %s34
      %s51 = sphi 0, %s35
      %s55 = sphi 0, %s55
      %s57 = sphi 0, %s55
      %s58 = sphi 0, %s57
      %s72 = sphi 0, %s58
      %s76 = sphi 0, %s76
      %s78 = sphi 0, %s76
      %s79 = sphi 0, %s78
      %s93 = sphi 0, %s79
      %s97 = sphi 0, %s97
      %s99 = sphi 0, %s97
      %s100 = sphi 0, %s99
      %s114 = sphi 0, %s100
      %s118 = sphi 0, %s118
      %s120 = sphi 0, %s118
      %s121 = sphi 0, %s120
      %s135 = sphi 0, %s121
      %s139 = sphi 0, %s139
      %s141 = sphi 0, %s139
      %s142 = sphi 0, %s141
      %s156 = sphi 0, %s142
      %s162 = sphi 0, %s164
      %s165 = sphi 0, %s162
      %s166 = sphi 0, %s165
      %s182 = sphi 0, %s166
    $region4: #{tpu_custom_call.1} parent=1 // loop_header_branch
      %24 = sbr.rel (%p22) target = $region8
    $region5: #{tpu_custom_call.1} parent=1 // loop_body
      %s26 = ssub.s32 %s21, 1
      %s27 = ssub.s32 %s21, 2
      %s28 = sadd.s32 %s21, 1
      %s29 = ssub.s32 %s21, %s28
      %p30 = scmp.eq.s32.totalorder %s29, 0
      %s32 = sadd.s32 %s31, 1
      %s33 = scalar_select %p30, %s31, %s32
      %p36 = pneg %p30
      %p37 = scmp.eq.s32.totalorder %s21, 1
      %p38 = por %p36, %p37
      %p39 = scmp.ne.s32.totalorder %s31, %s34
      %p40 = scmp.eq.s32.totalorder %s21, 0
      %p41 = por %p39, %p40
      %p42 = scmp.ne.s32.totalorder %s31, %s34
      %p43 = scmp.eq.s32.totalorder %s26, 1
      %p44 = por %p42, %p43
      %p45 = scmp.ne.s32.totalorder %s34, %s35
      %p46 = scmp.eq.s32.totalorder %s26, 0
      %p47 = por %p45, %p46
      %p48 = scmp.ne.s32.totalorder %s34, %s35
      %p49 = scmp.eq.s32.totalorder %s27, 1
      %p50 = por %p48, %p49
      %p52 = scmp.ne.s32.totalorder %s35, %s51
      %p53 = scmp.eq.s32.totalorder %s27, 0
      %p54 = por %p52, %p53
      %s56 = sadd.s32 %s55, 1
      %p59 = scmp.eq.s32.totalorder %s21, 1
      %p60 = scmp.ne.s32.totalorder %s55, %s57
      %p61 = scmp.eq.s32.totalorder %s21, 0
      %p62 = por %p60, %p61
      %p63 = scmp.ne.s32.totalorder %s55, %s57
      %p64 = scmp.eq.s32.totalorder %s26, 1
      %p65 = por %p63, %p64
      %p66 = scmp.ne.s32.totalorder %s57, %s58
      %p67 = scmp.eq.s32.totalorder %s26, 0
      %p68 = por %p66, %p67
      %p69 = scmp.ne.s32.totalorder %s57, %s58
      %p70 = scmp.eq.s32.totalorder %s27, 1
      %p71 = por %p69, %p70
      %p73 = scmp.ne.s32.totalorder %s58, %s72
      %p74 = scmp.eq.s32.totalorder %s27, 0
      %p75 = por %p73, %p74
      %s77 = sadd.s32 %s76, 1
      %p80 = scmp.eq.s32.totalorder %s21, 1
      %p81 = scmp.ne.s32.totalorder %s76, %s78
      %p82 = scmp.eq.s32.totalorder %s21, 0
      %p83 = por %p81, %p82
      %p84 = scmp.ne.s32.totalorder %s76, %s78
      %p85 = scmp.eq.s32.totalorder %s26, 1
      %p86 = por %p84, %p85
      %p87 = scmp.ne.s32.totalorder %s78, %s79
      %p88 = scmp.eq.s32.totalorder %s26, 0
      %p89 = por %p87, %p88
      %p90 = scmp.ne.s32.totalorder %s78, %s79
      %p91 = scmp.eq.s32.totalorder %s27, 1
      %p92 = por %p90, %p91
      %p94 = scmp.ne.s32.totalorder %s79, %s93
      %p95 = scmp.eq.s32.totalorder %s27, 0
      %p96 = por %p94, %p95
      %s98 = sadd.s32 %s97, 1
      %p101 = scmp.eq.s32.totalorder %s21, 1
      %p102 = scmp.ne.s32.totalorder %s97, %s99
      %p103 = scmp.eq.s32.totalorder %s21, 0
      %p104 = por %p102, %p103
      %p105 = scmp.ne.s32.totalorder %s97, %s99
      %p106 = scmp.eq.s32.totalorder %s26, 1
      %p107 = por %p105, %p106
      %p108 = scmp.ne.s32.totalorder %s99, %s100
      %p109 = scmp.eq.s32.totalorder %s26, 0
      %p110 = por %p108, %p109
      %p111 = scmp.ne.s32.totalorder %s99, %s100
      %p112 = scmp.eq.s32.totalorder %s27, 1
      %p113 = por %p111, %p112
      %p115 = scmp.ne.s32.totalorder %s100, %s114
      %p116 = scmp.eq.s32.totalorder %s27, 0
      %p117 = por %p115, %p116
      %s119 = sadd.s32 %s118, 1
      %p122 = scmp.eq.s32.totalorder %s21, 1
      %p123 = scmp.ne.s32.totalorder %s118, %s120
      %p124 = scmp.eq.s32.totalorder %s21, 0
      %p125 = por %p123, %p124
      %p126 = scmp.ne.s32.totalorder %s118, %s120
      %p127 = scmp.eq.s32.totalorder %s26, 1
      %p128 = por %p126, %p127
      %p129 = scmp.ne.s32.totalorder %s120, %s121
      %p130 = scmp.eq.s32.totalorder %s26, 0
      %p131 = por %p129, %p130
      %p132 = scmp.ne.s32.totalorder %s120, %s121
      %p133 = scmp.eq.s32.totalorder %s27, 1
      %p134 = por %p132, %p133
      %p136 = scmp.ne.s32.totalorder %s121, %s135
      %p137 = scmp.eq.s32.totalorder %s27, 0
      %p138 = por %p136, %p137
      %s140 = sadd.s32 %s139, 1
      %p143 = scmp.eq.s32.totalorder %s21, 1
      %p144 = scmp.ne.s32.totalorder %s139, %s141
      %p145 = scmp.eq.s32.totalorder %s21, 0
      %p146 = por %p144, %p145
      %p147 = scmp.ne.s32.totalorder %s139, %s141
      %p148 = scmp.eq.s32.totalorder %s26, 1
      %p149 = por %p147, %p148
      %p150 = scmp.ne.s32.totalorder %s141, %s142
      %p151 = scmp.eq.s32.totalorder %s26, 0
      %p152 = por %p150, %p151
      %p153 = scmp.ne.s32.totalorder %s141, %s142
      %p154 = scmp.eq.s32.totalorder %s27, 1
      %p155 = por %p153, %p154
      %p157 = scmp.ne.s32.totalorder %s142, %s156
      %p158 = scmp.eq.s32.totalorder %s27, 0
      %p159 = por %p157, %p158
      %s160 = ssub.s32 %s21, %s28
      %p161 = scmp.eq.s32.totalorder %s160, 0
      %s163 = sadd.s32 %s162, 1
      %s164 = scalar_select %p161, %s162, %s163
      %p167 = pneg %p161
      %p168 = scmp.eq.s32.totalorder %s21, 1
      %p169 = por %p167, %p168
      %p170 = scmp.ne.s32.totalorder %s162, %s165
      %p171 = scmp.eq.s32.totalorder %s21, 0
      %p172 = por %p170, %p171
      %p173 = scmp.ne.s32.totalorder %s162, %s165
      %p174 = scmp.eq.s32.totalorder %s26, 1
      %p175 = por %p173, %p174
      %p176 = scmp.ne.s32.totalorder %s165, %s166
      %p177 = scmp.eq.s32.totalorder %s26, 0
      %p178 = por %p176, %p177
      %p179 = scmp.ne.s32.totalorder %s165, %s166
      %p180 = scmp.eq.s32.totalorder %s27, 1
      %p181 = por %p179, %p180
      %p183 = scmp.ne.s32.totalorder %s166, %s182
      %p184 = scmp.eq.s32.totalorder %s27, 0
      %p185 = por %p183, %p184
      %p186 = scmp.le.s32.totalorder 1, %s21
      %p187 = scmp.lt.s32.totalorder %s21, 3
      %p188 = pnand %p186, %p187
      %p189 = pneg %p188
      // Predicated region
      $region9: #{tpu_custom_call.1} parent=5 // pred_check
        _
      $region10: #{tpu_custom_call.1} parent=5 // pred_check_branch
        %191 = sbr.rel (%p188) target = $region12
      $region11: #{tpu_custom_call.1} parent=5 // pred_region
        %s192 = ssub.s32 %s21, 1
        // Predicated region
        $region13: #{tpu_custom_call.1} parent=11 // pred_check
          %p193 = pneg %p68
        $region14: #{tpu_custom_call.1} parent=11 // pred_check_branch
          %195 = sbr.rel (%p193) target = $region16
        $region15: #{tpu_custom_call.1} parent=11 // pred_region
          %s197 = ssub.s32 3072, 3072
          %198 = vsyncadd [#allocation6], %s197
          %s199 = sshll.u32 [#allocation5], 4
          %s200 = int_to_ptr.vmem [resolvable:$true] %s199
          %205 = dma.hbm_to_vmem [thread:$0]  %s1, 3072, %s200, [#allocation6], 192, 192, 12
        $region16: #{tpu_custom_call.1} parent=11 // pred_fallthru
          _
        // Predicated region
        $region17: #{tpu_custom_call.1} parent=11 // pred_check
          %p206 = pneg %p89
        $region18: #{tpu_custom_call.1} parent=11 // pred_check_branch
          %208 = sbr.rel (%p206) target = $region20
        $region19: #{tpu_custom_call.1} parent=11 // pred_region
          %s210 = ssub.s32 4096, 4096
          %211 = vsyncadd [#allocation6], %s210
          %s212 = sshll.u32 [#allocation7], 4
          %s213 = int_to_ptr.vmem [resolvable:$true] %s212
          %218 = dma.hbm_to_vmem [thread:$0]  %s2, 4096, %s213, [#allocation6], 256, 256, 16
        $region20: #{tpu_custom_call.1} parent=11 // pred_fallthru
          _
        // Predicated region
        $region21: #{tpu_custom_call.1} parent=11 // pred_check
          %p219 = pneg %p110
        $region22: #{tpu_custom_call.1} parent=11 // pred_check_branch
          %221 = sbr.rel (%p219) target = $region24
        $region23: #{tpu_custom_call.1} parent=11 // pred_region
          %s223 = ssub.s32 4096, 4096
          %224 = vsyncadd [#allocation9], %s223
          %s225 = sshll.u32 [#allocation8], 4
          %s226 = int_to_ptr.vmem [resolvable:$true] %s225
          %231 = dma.hbm_to_vmem [thread:$0]  %s3, 4096, %s226, [#allocation9], 64, 64, 4
        $region24: #{tpu_custom_call.1} parent=11 // pred_fallthru
          _
        // Predicated region
        $region25: #{tpu_custom_call.1} parent=11 // pred_check
          %p232 = pneg %p131
        $region26: #{tpu_custom_call.1} parent=11 // pred_check_branch
          %234 = sbr.rel (%p232) target = $region28
        $region27: #{tpu_custom_call.1} parent=11 // pred_region
          %s236 = ssub.s32 512, 512
          %237 = vsyncadd [#allocation9], %s236
          %s239 = sshll.u32 [#allocation10], 4
          %s240 = int_to_ptr.vmem [resolvable:$true] %s239
          %242 = dma.hbm_to_vmem [thread:$0]  %s4, 512, %s240, [#allocation9]
        $region28: #{tpu_custom_call.1} parent=11 // pred_fallthru
          _
        // Predicated region
        $region29: #{tpu_custom_call.1} parent=11 // pred_check
          %p243 = pneg %p152
        $region30: #{tpu_custom_call.1} parent=11 // pred_check_branch
          %245 = sbr.rel (%p243) target = $region32
        $region31: #{tpu_custom_call.1} parent=11 // pred_region
          %s247 = ssub.s32 2048, 2048
          %248 = vsyncadd [#allocation12], %s247
          %s249 = sshll.u32 [#allocation11], 4
          %s250 = int_to_ptr.vmem [resolvable:$true] %s249
          %255 = dma.hbm_to_vmem [thread:$0]  %s5, 2048, %s250, [#allocation12], 128, 128, 8
        $region32: #{tpu_custom_call.1} parent=11 // pred_fallthru
          _
      $region12: #{tpu_custom_call.1} parent=5 // pred_fallthru
        _
      %p256 = scmp.lt.s32.totalorder %s21, 2
      // Predicated region
      $region33: #{tpu_custom_call.1} parent=5 // pred_check
        %p257 = pneg %p256
      $region34: #{tpu_custom_call.1} parent=5 // pred_check_branch
        %259 = sbr.rel (%p257) target = $region36
      $region35: #{tpu_custom_call.1} parent=5 // pred_region
        // Predicated region
        $region37: #{tpu_custom_call.1} parent=35 // pred_check
          %p260 = pneg %p41
        $region38: #{tpu_custom_call.1} parent=35 // pred_check_branch
          %262 = sbr.rel (%p260) target = $region40
        $region39: #{tpu_custom_call.1} parent=35 // pred_region
          %s263 = sand.u32 %s31, 1
          %s264 = scalar_lea.sflag [#allocation3], %s263
          %s265 = sand.u32 %s31, 1
          %s266 = smul.addr %s265, 8
          %s267 = scalar_lea.vmem [#allocation2], %s266
          %s269 = ssub.s32 128, 128
          %270 = vsyncadd %s264, %s269
          %s271 = smul.addr %s21, 128
          %s272 = scalar_lea.hbm %s0, %s271
          %s274 = sshll.u32 %s267, 4
          %s275 = int_to_ptr.vmem [resolvable:$true] %s274
          %277 = dma.hbm_to_vmem [thread:$0]  %s272, 128, %s275, %s264
        $region40: #{tpu_custom_call.1} parent=35 // pred_fallthru
          _
      $region36: #{tpu_custom_call.1} parent=5 // pred_fallthru
        _
      %p278 = scmp.le.s32.totalorder 1, %s21
      %p279 = scmp.lt.s32.totalorder %s21, 3
      %p280 = pnand %p278, %p279
      %p281 = pneg %p280
      // Predicated region
      $region41: #{tpu_custom_call.1} parent=5 // pred_check
        _
      $region42: #{tpu_custom_call.1} parent=5 // pred_check_branch
        %283 = sbr.rel (%p280) target = $region44
      $region43: #{tpu_custom_call.1} parent=5 // pred_region
        %s284 = ssub.s32 %s21, 1
        %s285 = sand.u32 %s34, 1
        %s286 = scalar_lea.sflag [#allocation3], %s285
        %s287 = sand.u32 %s34, 1
        %s288 = smul.addr %s287, 8
        %s289 = scalar_lea.vmem [#allocation2], %s288
        // Predicated region
        $region45: #{tpu_custom_call.1} parent=43 // pred_check
          %p290 = pneg %p47
        $region46: #{tpu_custom_call.1} parent=43 // pred_check_branch
          %292 = sbr.rel (%p290) target = $region48
        $region47: #{tpu_custom_call.1} parent=43 // pred_region
          %293 = dma.done %s286, 128
        $region48: #{tpu_custom_call.1} parent=43 // pred_fallthru
          _
        // Predicated region
        $region49: #{tpu_custom_call.1} parent=43 // pred_check
          %p294 = pneg %p68
        $region50: #{tpu_custom_call.1} parent=43 // pred_check_branch
          %296 = sbr.rel (%p294) target = $region52
        $region51: #{tpu_custom_call.1} parent=43 // pred_region
          %297 = dma.done [#allocation6], 3072
        $region52: #{tpu_custom_call.1} parent=43 // pred_fallthru
          _
        // Predicated region
        $region53: #{tpu_custom_call.1} parent=43 // pred_check
          %p298 = pneg %p89
        $region54: #{tpu_custom_call.1} parent=43 // pred_check_branch
          %300 = sbr.rel (%p298) target = $region56
        $region55: #{tpu_custom_call.1} parent=43 // pred_region
          %301 = dma.done [#allocation6], 4096
        $region56: #{tpu_custom_call.1} parent=43 // pred_fallthru
          _
        // Predicated region
        $region57: #{tpu_custom_call.1} parent=43 // pred_check
          %p302 = pneg %p110
        $region58: #{tpu_custom_call.1} parent=43 // pred_check_branch
          %304 = sbr.rel (%p302) target = $region60
        $region59: #{tpu_custom_call.1} parent=43 // pred_region
          %305 = dma.done [#allocation9], 4096
        $region60: #{tpu_custom_call.1} parent=43 // pred_fallthru
          _
        // Predicated region
        $region61: #{tpu_custom_call.1} parent=43 // pred_check
          %p306 = pneg %p131
        $region62: #{tpu_custom_call.1} parent=43 // pred_check_branch
          %308 = sbr.rel (%p306) target = $region64
        $region63: #{tpu_custom_call.1} parent=43 // pred_region
          %309 = dma.done [#allocation9], 512
        $region64: #{tpu_custom_call.1} parent=43 // pred_fallthru
          _
        // Predicated region
        $region65: #{tpu_custom_call.1} parent=43 // pred_check
          %p310 = pneg %p152
        $region66: #{tpu_custom_call.1} parent=43 // pred_check_branch
          %312 = sbr.rel (%p310) target = $region68
        $region67: #{tpu_custom_call.1} parent=43 // pred_region
          %313 = dma.done [#allocation12], 2048
        $region68: #{tpu_custom_call.1} parent=43 // pred_fallthru
          _
        %s314 = sand.u32 %s34, 1
        %s315 = scalar_lea.sflag [#allocation3], %s314
        %s316 = sand.u32 %s34, 1
        %s317 = smul.addr %s316, 8
        %s318 = scalar_lea.vmem [#allocation2], %s317
        %p319 = pneg %p47
        %p320 = pneg %p44
        %p321 = pneg %p68
        %p322 = pneg %p65
        %p323 = pneg %p89
        %p324 = pneg %p86
        %p325 = pneg %p110
        %p326 = pneg %p107
        %p327 = pneg %p131
        %p328 = pneg %p128
        %p329 = pneg %p152
        %p330 = pneg %p149
        %p331 = pneg %p178
        %p332 = pneg %p175
        %s333 = sand.u32 %s165, 1
        %s334 = scalar_lea.sflag [#allocation4], %s333
        %s335 = sand.u32 %s165, 1
        %s336 = smul.addr %s335, 8
        %s337 = scalar_lea.vmem [#allocation13], %s336
        %v339 = vld [vmem:[%s289] sm:$0xff]
        %v340 = vpack.c.bf16 %v339, %v339
        %v341 = vld [vmem:[#allocation10] sm:$0xff]
        %v342 = vld [vmem:[#allocation10 + $0x8] sm:$0xff]
        %v343 = vld [vmem:[#allocation10 + $0x10] sm:$0xff]
        %v344 = vld [vmem:[#allocation10 + $0x18] sm:$0xff]
        %v345 = vld [vmem:[#allocation5] sm:$0xff]
        %v346 = vld [vmem:[#allocation5 + $0x8] sm:$0xf]
        %v347 = vld [vmem:[#allocation5 + $0xc] sm:$0xff]
        %v348 = vld [vmem:[#allocation5 + $0x14] sm:$0xf]
        %v349 = vld [vmem:[#allocation5 + $0x18] sm:$0xff]
        %v350 = vld [vmem:[#allocation5 + $0x20] sm:$0xf]
        %v351 = vld [vmem:[#allocation5 + $0x24] sm:$0xff]
        %v352 = vld [vmem:[#allocation5 + $0x2c] sm:$0xf]
        %v353 = vld [vmem:[#allocation5 + $0x30] sm:$0xff]
        %v354 = vld [vmem:[#allocation5 + $0x38] sm:$0xf]
        %v355 = vld [vmem:[#allocation5 + $0x3c] sm:$0xff]
        %v356 = vld [vmem:[#allocation5 + $0x44] sm:$0xf]
        %v357 = vld [vmem:[#allocation5 + $0x48] sm:$0xff]
        %v358 = vld [vmem:[#allocation5 + $0x50] sm:$0xf]
        %v359 = vld [vmem:[#allocation5 + $0x54] sm:$0xff]
        %v360 = vld [vmem:[#allocation5 + $0x5c] sm:$0xf]
        %v361 = vld [vmem:[#allocation5 + $0x60] sm:$0xff]
        %v362 = vld [vmem:[#allocation5 + $0x68] sm:$0xf]
        %v363 = vld [vmem:[#allocation5 + $0x6c] sm:$0xff]
        %v364 = vld [vmem:[#allocation5 + $0x74] sm:$0xf]
        %v365 = vld [vmem:[#allocation5 + $0x78] sm:$0xff]
        %v366 = vld [vmem:[#allocation5 + $0x80] sm:$0xf]
        %v367 = vld [vmem:[#allocation5 + $0x84] sm:$0xff]
        %v368 = vld [vmem:[#allocation5 + $0x8c] sm:$0xf]
        %v369 = vld [vmem:[#allocation5 + $0x90] sm:$0xff]
        %v370 = vld [vmem:[#allocation5 + $0x98] sm:$0xf]
        %v371 = vld [vmem:[#allocation5 + $0x9c] sm:$0xff]
        %v372 = vld [vmem:[#allocation5 + $0xa4] sm:$0xf]
        %v373 = vld [vmem:[#allocation5 + $0xa8] sm:$0xff]
        %v374 = vld [vmem:[#allocation5 + $0xb0] sm:$0xf]
        %v375 = vld [vmem:[#allocation5 + $0xb4] sm:$0xff]
        %v376 = vld [vmem:[#allocation5 + $0xbc] sm:$0xf]
        %v377 = vlaneseq
        %v378 = vshrl.u32 %v377, 7
        %v379 = vsub.s32 0, %v378
        %v380 = vrot.slane %v341, %v379
        %v381 = vlaneseq
        %v382 = vshrl.u32 %v381, 7
        %v383 = vsub.s32 0, %v382
        %v384 = vrot.slane %v342, %v383
        %v385 = vlaneseq
        %v386 = vshrl.u32 %v385, 7
        %v387 = vsub.s32 0, %v386
        %v388 = vrot.slane %v343, %v387
        %v421 = vunpack.c.l.b16 %v345
        %v422 = vunpack.c.h.b16 %v345
        %v423 = vunpack.c.l.b16 %v346
        %v424 = vunpack.c.l.b16 %v347
        %v425 = vunpack.c.h.b16 %v347
        %v426 = vunpack.c.l.b16 %v348
        %v427 = vunpack.c.l.b16 %v349
        %v428 = vunpack.c.h.b16 %v349
        %v429 = vunpack.c.l.b16 %v350
        %v430 = vunpack.c.l.b16 %v351
        %v431 = vunpack.c.h.b16 %v351
        %v432 = vunpack.c.l.b16 %v352
        %v433 = vunpack.c.l.b16 %v353
        %v434 = vunpack.c.h.b16 %v353
        %v435 = vunpack.c.l.b16 %v354
        %v436 = vunpack.c.l.b16 %v355
        %v437 = vunpack.c.h.b16 %v355
        %v438 = vunpack.c.l.b16 %v356
        %v439 = vunpack.c.l.b16 %v357
        %v440 = vunpack.c.h.b16 %v357
        %v441 = vunpack.c.l.b16 %v358
        %v442 = vunpack.c.l.b16 %v359
        %v443 = vunpack.c.h.b16 %v359
        %v444 = vunpack.c.l.b16 %v360
        %v445 = vunpack.c.l.b16 %v361
        %v446 = vunpack.c.h.b16 %v361
        %v447 = vunpack.c.l.b16 %v362
        %v448 = vunpack.c.l.b16 %v363
        %v449 = vunpack.c.h.b16 %v363
        %v450 = vunpack.c.l.b16 %v364
        %v451 = vunpack.c.l.b16 %v365
        %v452 = vunpack.c.h.b16 %v365
        %v453 = vunpack.c.l.b16 %v366
        %v454 = vunpack.c.l.b16 %v367
        %v455 = vunpack.c.h.b16 %v367
        %v456 = vunpack.c.l.b16 %v368
        %v457 = vunpack.c.l.b16 %v369
        %v458 = vunpack.c.h.b16 %v369
        %v459 = vunpack.c.l.b16 %v370
        %v460 = vunpack.c.l.b16 %v371
        %v461 = vunpack.c.h.b16 %v371
        %v462 = vunpack.c.l.b16 %v372
        %v463 = vunpack.c.l.b16 %v373
        %v464 = vunpack.c.h.b16 %v373
        %v465 = vunpack.c.l.b16 %v374
        %v466 = vunpack.c.l.b16 %v375
        %v467 = vunpack.c.h.b16 %v375
        %v468 = vunpack.c.l.b16 %v376
        %v469 = vpack.c.b16 %v424, %v421
        %v470 = vpack.c.b16 %v425, %v422
        %v471 = vpack.c.b16 %v426, %v423
        %v472 = vpack.c.b16 %v430, %v427
        %v473 = vpack.c.b16 %v431, %v428
        %v474 = vpack.c.b16 %v432, %v429
        %v475 = vpack.c.b16 %v436, %v433
        %v476 = vpack.c.b16 %v437, %v434
        %v477 = vpack.c.b16 %v438, %v435
        %v478 = vpack.c.b16 %v442, %v439
        %v479 = vpack.c.b16 %v443, %v440
        %v480 = vpack.c.b16 %v444, %v441
        %v481 = vpack.c.b16 %v448, %v445
        %v482 = vpack.c.b16 %v449, %v446
        %v483 = vpack.c.b16 %v450, %v447
        %v484 = vpack.c.b16 %v454, %v451
        %v485 = vpack.c.b16 %v455, %v452
        %v486 = vpack.c.b16 %v456, %v453
        %v487 = vpack.c.b16 %v460, %v457
        %v488 = vpack.c.b16 %v461, %v458
        %v489 = vpack.c.b16 %v462, %v459
        %v490 = vpack.c.b16 %v466, %v463
        %v491 = vpack.c.b16 %v467, %v464
        %v492 = vpack.c.b16 %v468, %v465
        %517 = vmatprep.subr.bf16.mxu0 %v470
        %518 = vmatpush1.bf16.msra.mxu0 %v469
        %519 = vmatprep.subr.bf16.mxu0 %v473
        %520 = vmatpush1.bf16.msra.mxu0 %v472
        %521 = vmatprep.subr.bf16.mxu0 %v476
        %522 = vmatpush1.bf16.msra.mxu0 %v475
        %523 = vmatprep.subr.bf16.mxu0 %v479
        %524 = vmatpush1.bf16.msra.mxu0 %v478
        %525 = vmatprep.subr.bf16.mxu0 %v482
        %526 = vmatpush1.bf16.msra.mxu0 %v481
        %527 = vmatprep.subr.bf16.mxu0 %v485
        %528 = vmatpush1.bf16.msra.mxu0 %v484
        %529 = vmatprep.subr.bf16.mxu0 %v488
        %530 = vmatpush1.bf16.msra.mxu0 %v487
        %531 = vmatprep.subr.bf16.mxu0 %v491
        %532 = vmatpush1.bf16.msra.mxu0 %v490
        %533 = vmatprep.subr.bf16.mxu0 0
        %534 = vmatpush1.bf16.msra.mxu0 0
        %535 = vmatprep.subr.bf16.mxu0 0
        %536 = vmatpush1.bf16.msra.mxu0 0
        %537 = vmatprep.subr.bf16.mxu0 0
        %538 = vmatpush1.bf16.msra.mxu0 0
        %539 = vmatprep.subr.bf16.mxu0 0
        %540 = vmatpush1.bf16.msra.mxu0 0
        %541 = vmatprep.subr.bf16.mxu0 0
        %542 = vmatpush1.bf16.msra.mxu0 0
        %543 = vmatprep.subr.bf16.mxu0 0
        %544 = vmatpush1.bf16.msra.mxu0 0
        %545 = vmatprep.subr.bf16.mxu0 0
        %546 = vmatpush1.bf16.msra.mxu0 0
        %547 = vmatprep.subr.bf16.mxu0 0
        %548 = vmatpush1.bf16.msra.mxu0 0
        %549 = vmatprep.mubr.bf16.mxu0 0
        %550 = vmatmul.mubr.bf16.gmra.mrb[0].mxu0 %v340
        %v551 = vpop.f32.mrb[0].mxu0
        %v552 = vadd.f32 %v380, %v551
        %v553 = vpop.f32.mrb[0].mxu0
        %v554 = vadd.f32 %v384, %v553
        %v555 = vpop.f32.mrb[0].mxu0
        %v556 = vpop.f32.mrb[0].mxu0
        %557 = vdwg.mxu0
        %558 = vmatprep.subr.bf16.mxu0 0
        %559 = vmatpush1.bf16.msra.mxu0 %v471
        %560 = vmatprep.subr.bf16.mxu0 0
        %561 = vmatpush1.bf16.msra.mxu0 %v474
        %562 = vmatprep.subr.bf16.mxu0 0
        %563 = vmatpush1.bf16.msra.mxu0 %v477
        %564 = vmatprep.subr.bf16.mxu0 0
        %565 = vmatpush1.bf16.msra.mxu0 %v480
        %566 = vmatprep.subr.bf16.mxu0 0
        %567 = vmatpush1.bf16.msra.mxu0 %v483
        %568 = vmatprep.subr.bf16.mxu0 0
        %569 = vmatpush1.bf16.msra.mxu0 %v486
        %570 = vmatprep.subr.bf16.mxu0 0
        %571 = vmatpush1.bf16.msra.mxu0 %v489
        %572 = vmatprep.subr.bf16.mxu0 0
        %573 = vmatpush1.bf16.msra.mxu0 %v492
        %574 = vmatprep.subr.bf16.mxu0 0
        %575 = vmatpush1.bf16.msra.mxu0 0
        %576 = vmatprep.subr.bf16.mxu0 0
        %577 = vmatpush1.bf16.msra.mxu0 0
        %578 = vmatprep.subr.bf16.mxu0 0
        %579 = vmatpush1.bf16.msra.mxu0 0
        %580 = vmatprep.subr.bf16.mxu0 0
        %581 = vmatpush1.bf16.msra.mxu0 0
        %582 = vmatprep.subr.bf16.mxu0 0
        %583 = vmatpush1.bf16.msra.mxu0 0
        %584 = vmatprep.subr.bf16.mxu0 0
        %585 = vmatpush1.bf16.msra.mxu0 0
        %586 = vmatprep.subr.bf16.mxu0 0
        %587 = vmatpush1.bf16.msra.mxu0 0
        %588 = vmatprep.subr.bf16.mxu0 0
        %589 = vmatpush1.bf16.msra.mxu0 0
        %590 = vmatprep.mubr.bf16.mxu0 0
        %591 = vmatmul.mubr.bf16.gmra.mrb[0].mxu0 %v340
        %v592 = vpop.f32.mrb[0].mxu0
        %v593 = vadd.f32 %v388, %v592
        %v594 = vpop.f32.mrb[0].mxu0
        %v595 = vpop.f32.mrb[0].mxu0
        %v596 = vpop.f32.mrb[0].mxu0
        %597 = vdwg.mxu0
        %v598 = vpack.c.bf16 %v552, %v552
        %v599 = vld [vmem:[#allocation11] sm:$0xff]
        %v600 = vld [vmem:[#allocation11 + $0x8] sm:$0xff]
        %v601 = vld [vmem:[#allocation11 + $0x10] sm:$0xff]
        %v602 = vld [vmem:[#allocation11 + $0x18] sm:$0xff]
        %v603 = vld [vmem:[#allocation11 + $0x20] sm:$0xff]
        %v604 = vld [vmem:[#allocation11 + $0x28] sm:$0xff]
        %v605 = vld [vmem:[#allocation11 + $0x30] sm:$0xff]
        %v606 = vld [vmem:[#allocation11 + $0x38] sm:$0xff]
        %v607 = vld [vmem:[#allocation11 + $0x40] sm:$0xff]
        %v608 = vld [vmem:[#allocation11 + $0x48] sm:$0xff]
        %v609 = vld [vmem:[#allocation11 + $0x50] sm:$0xff]
        %v610 = vld [vmem:[#allocation11 + $0x58] sm:$0xff]
        %v611 = vld [vmem:[#allocation11 + $0x60] sm:$0xff]
        %v612 = vld [vmem:[#allocation11 + $0x68] sm:$0xff]
        %v613 = vld [vmem:[#allocation11 + $0x70] sm:$0xff]
        %v614 = vld [vmem:[#allocation11 + $0x78] sm:$0xff]
        %615 = vxpose.xlu0.b32.start [1/16] %v554, 128
        %616 = vxpose.xlu0.b32.cont [2/16] 0.0, 128
        %617 = vxpose.xlu0.b32.cont [3/16] 0.0, 128
        %618 = vxpose.xlu0.b32.cont [4/16] 0.0, 128
        %619 = vxpose.xlu0.b32.cont [5/16] 0.0, 128
        %620 = vxpose.xlu0.b32.cont [6/16] 0.0, 128
        %621 = vxpose.xlu0.b32.cont [7/16] 0.0, 128
        %622 = vxpose.xlu0.b32.cont [8/16] 0.0, 128
        %623 = vxpose.xlu0.b32.cont [9/16] 0.0, 128
        %624 = vxpose.xlu0.b32.cont [10/16] 0.0, 128
        %625 = vxpose.xlu0.b32.cont [11/16] 0.0, 128
        %626 = vxpose.xlu0.b32.cont [12/16] 0.0, 128
        %627 = vxpose.xlu0.b32.cont [13/16] 0.0, 128
        %628 = vxpose.xlu0.b32.cont [14/16] 0.0, 128
        %629 = vxpose.xlu0.b32.cont [15/16] 0.0, 128
        %630 = vxpose.xlu0.b32.end [16/16] 0.0, 128
        %v631 = vpop.trf.xlu0
        %v632 = vpop.trf.xlu0
        %v633 = vpop.trf.xlu0
        %v634 = vpop.trf.xlu0
        %v635 = vpop.trf.xlu0
        %v636 = vpop.trf.xlu0
        %v637 = vpop.trf.xlu0
        %v638 = vpop.trf.xlu0
        %v639 = vpop.trf.xlu0
        %v640 = vpop.trf.xlu0
        %v641 = vpop.trf.xlu0
        %v642 = vpop.trf.xlu0
        %v643 = vpop.trf.xlu0
        %v644 = vpop.trf.xlu0
        %v645 = vpop.trf.xlu0
        %v646 = vpop.trf.xlu0
        %vm647 = vcmask 64512
        %v649 = vsel %vm647, %v631, 0
        %v652 = vsel %vm647, %v632, 0
        %v655 = vsel %vm647, %v633, 0
        %v658 = vsel %vm647, %v634, 0
        %v661 = vsel %vm647, %v635, 0
        %v664 = vsel %vm647, %v636, 0
        %v667 = vsel %vm647, %v637, 0
        %v670 = vsel %vm647, %v638, 0
        %v673 = vsel %vm647, %v639, 0
        %v676 = vsel %vm647, %v640, 0
        %v679 = vsel %vm647, %v641, 0
        %v682 = vsel %vm647, %v642, 0
        %v685 = vsel %vm647, %v643, 0
        %v688 = vsel %vm647, %v644, 0
        %v691 = vsel %vm647, %v645, 0
        %v694 = vsel %vm647, %v646, 0
        %696 = vmatprep.subr.mxu0 0.0
        %697 = vmatpush1.msra.mxu0 %v593
        %698 = vmatprep.subr.mxu0 0.0
        %699 = vmatpush1.msra.mxu0 0.0
        %700 = vmatprep.subr.mxu0 0.0
        %701 = vmatpush1.msra.mxu0 0.0
        %702 = vmatprep.subr.mxu0 0.0
        %703 = vmatpush1.msra.mxu0 0.0
        %704 = vmatprep.subr.mxu0 0.0
        %705 = vmatpush1.msra.mxu0 0.0
        %706 = vmatprep.subr.mxu0 0.0
        %707 = vmatpush1.msra.mxu0 0.0
        %708 = vmatprep.subr.mxu0 0.0
        %709 = vmatpush1.msra.mxu0 0.0
        %710 = vmatprep.subr.mxu0 0.0
        %711 = vmatpush1.msra.mxu0 0.0
        %712 = vmatprep.subr.mxu0 0.0
        %713 = vmatpush1.msra.mxu0 0.0
        %714 = vmatprep.subr.mxu0 0.0
        %715 = vmatpush1.msra.mxu0 0.0
        %716 = vmatprep.subr.mxu0 0.0
        %717 = vmatpush1.msra.mxu0 0.0
        %718 = vmatprep.subr.mxu0 0.0
        %719 = vmatpush1.msra.mxu0 0.0
        %720 = vmatprep.subr.mxu0 0.0
        %721 = vmatpush1.msra.mxu0 0.0
        %722 = vmatprep.subr.mxu0 0.0
        %723 = vmatpush1.msra.mxu0 0.0
        %724 = vmatprep.subr.mxu0 0.0
        %725 = vmatpush1.msra.mxu0 0.0
        %726 = vmatprep.subr.mxu0 0.0
        %727 = vmatpush1.msra.mxu0 0.0
        %728 = vmatprep.subr.mxu0 0.0
        %729 = vmatpush1.msra.mxu0 0.0
        %730 = vmatprep.subr.mxu0 0.0
        %731 = vmatpush1.msra.mxu0 0.0
        %732 = vmatprep.subr.mxu0 0.0
        %733 = vmatpush1.msra.mxu0 0.0
        %734 = vmatprep.subr.mxu0 0.0
        %735 = vmatpush1.msra.mxu0 0.0
        %736 = vmatprep.subr.mxu0 0.0
        %737 = vmatpush1.msra.mxu0 0.0
        %738 = vmatprep.subr.mxu0 0.0
        %739 = vmatpush1.msra.mxu0 0.0
        %740 = vmatprep.subr.mxu0 0.0
        %741 = vmatpush1.msra.mxu0 0.0
        %742 = vmatprep.subr.mxu0 0.0
        %743 = vmatpush1.msra.mxu0 0.0
        %744 = vmatprep.subr.mxu0 0.0
        %745 = vmatpush1.msra.mxu0 0.0
        %746 = vmatprep.subr.mxu0 0.0
        %747 = vmatpush1.msra.mxu0 0.0
        %748 = vmatprep.subr.mxu0 0.0
        %749 = vmatpush1.msra.mxu0 0.0
        %750 = vmatprep.subr.mxu0 0.0
        %751 = vmatpush1.msra.mxu0 0.0
        %752 = vmatprep.subr.mxu0 0.0
        %753 = vmatpush1.msra.mxu0 0.0
        %754 = vmatprep.subr.mxu0 0.0
        %755 = vmatpush1.msra.mxu0 0.0
        %756 = vmatprep.subr.mxu0 0.0
        %757 = vmatpush1.msra.mxu0 0.0
        %758 = vmatprep.subr.mxu0 0.0
        %759 = vmatpush1.msra.mxu0 0.0
        %760 = vmatprep.mubr.f32.mxu0 0.0
        %761 = vmatmul.mubr.f32.gmra.mrb[0].mxu0 %v649
        %v762 = vpop.f32.mrb[0].mxu0
        %v763 = vadd.f32 0.0, %v762
        %v764 = vpop.f32.mrb[0].mxu0
        %765 = vmatprep.mubr.f32.mxu0 0.0
        %766 = vmatmul.mubr.f32.gmra.mrb[0].mxu0 %v652
        %v767 = vpop.f32.mrb[0].mxu0
        %v768 = vadd.f32 0.0, %v767
        %v769 = vpop.f32.mrb[0].mxu0
        %770 = vmatprep.mubr.f32.mxu0 0.0
        %771 = vmatmul.mubr.f32.gmra.mrb[0].mxu0 %v655
        %v772 = vpop.f32.mrb[0].mxu0
        %v773 = vadd.f32 0.0, %v772
        %v774 = vpop.f32.mrb[0].mxu0
        %775 = vmatprep.mubr.f32.mxu0 0.0
        %776 = vmatmul.mubr.f32.gmra.mrb[0].mxu0 %v658
        %v777 = vpop.f32.mrb[0].mxu0
        %v778 = vadd.f32 0.0, %v777
        %v779 = vpop.f32.mrb[0].mxu0
        %780 = vmatprep.mubr.f32.mxu0 0.0
        %781 = vmatmul.mubr.f32.gmra.mrb[0].mxu0 %v661
        %v782 = vpop.f32.mrb[0].mxu0
        %v783 = vadd.f32 0.0, %v782
        %v784 = vpop.f32.mrb[0].mxu0
        %785 = vmatprep.mubr.f32.mxu0 0.0
        %786 = vmatmul.mubr.f32.gmra.mrb[0].mxu0 %v664
        %v787 = vpop.f32.mrb[0].mxu0
        %v788 = vadd.f32 0.0, %v787
        %v789 = vpop.f32.mrb[0].mxu0
        %790 = vmatprep.mubr.f32.mxu0 0.0
        %791 = vmatmul.mubr.f32.gmra.mrb[0].mxu0 %v667
        %v792 = vpop.f32.mrb[0].mxu0
        %v793 = vadd.f32 0.0, %v792
        %v794 = vpop.f32.mrb[0].mxu0
        %795 = vmatprep.mubr.f32.mxu0 0.0
        %796 = vmatmul.mubr.f32.gmra.mrb[0].mxu0 %v670
        %v797 = vpop.f32.mrb[0].mxu0
        %v798 = vadd.f32 0.0, %v797
        %v799 = vpop.f32.mrb[0].mxu0
        %800 = vmatprep.mubr.f32.mxu0 0.0
        %801 = vmatmul.mubr.f32.gmra.mrb[0].mxu0 %v673
        %v802 = vpop.f32.mrb[0].mxu0
        %v803 = vadd.f32 0.0, %v802
        %v804 = vpop.f32.mrb[0].mxu0
        %805 = vmatprep.mubr.f32.mxu0 0.0
        %806 = vmatmul.mubr.f32.gmra.mrb[0].mxu0 %v676
        %v807 = vpop.f32.mrb[0].mxu0
        %v808 = vadd.f32 0.0, %v807
        %v809 = vpop.f32.mrb[0].mxu0
        %810 = vmatprep.mubr.f32.mxu0 0.0
        %811 = vmatmul.mubr.f32.gmra.mrb[0].mxu0 %v679
        %v812 = vpop.f32.mrb[0].mxu0
        %v813 = vadd.f32 0.0, %v812
        %v814 = vpop.f32.mrb[0].mxu0
        %815 = vmatprep.mubr.f32.mxu0 0.0
        %816 = vmatmul.mubr.f32.gmra.mrb[0].mxu0 %v682
        %v817 = vpop.f32.mrb[0].mxu0
        %v818 = vadd.f32 0.0, %v817
        %v819 = vpop.f32.mrb[0].mxu0
        %820 = vmatprep.mubr.f32.mxu0 0.0
        %821 = vmatmul.mubr.f32.gmra.mrb[0].mxu0 %v685
        %v822 = vpop.f32.mrb[0].mxu0
        %v823 = vadd.f32 0.0, %v822
        %v824 = vpop.f32.mrb[0].mxu0
        %825 = vmatprep.mubr.f32.mxu0 0.0
        %826 = vmatmul.mubr.f32.gmra.mrb[0].mxu0 %v688
        %v827 = vpop.f32.mrb[0].mxu0
        %v828 = vadd.f32 0.0, %v827
        %v829 = vpop.f32.mrb[0].mxu0
        %830 = vmatprep.mubr.f32.mxu0 0.0
        %831 = vmatmul.mubr.f32.gmra.mrb[0].mxu0 %v691
        %v832 = vpop.f32.mrb[0].mxu0
        %v833 = vadd.f32 0.0, %v832
        %v834 = vpop.f32.mrb[0].mxu0
        %835 = vmatprep.mubr.f32.mxu0 0.0
        %836 = vmatmul.mubr.f32.gmra.mrb[0].mxu0 %v694
        %v837 = vpop.f32.mrb[0].mxu0
        %v838 = vadd.f32 0.0, %v837
        %v839 = vpop.f32.mrb[0].mxu0
        %840 = vdwg.mxu0
        %v841 = vmul.f32 %v763, %v599
        %v842 = vmul.f32 %v768, %v600
        %v843 = vmul.f32 %v773, %v601
        %v844 = vmul.f32 %v778, %v602
        %v845 = vmul.f32 %v783, %v603
        %v846 = vmul.f32 %v788, %v604
        %v847 = vmul.f32 %v793, %v605
        %v848 = vmul.f32 %v798, %v606
        %v849 = vmul.f32 %v803, %v607
        %v850 = vmul.f32 %v808, %v608
        %v851 = vmul.f32 %v813, %v609
        %v852 = vmul.f32 %v818, %v610
        %v853 = vmul.f32 %v823, %v611
        %v854 = vmul.f32 %v828, %v612
        %v855 = vmul.f32 %v833, %v613
        %v856 = vmul.f32 %v838, %v614
        %v857 = vpack.c.bf16 %v842, %v841
        %v858 = vpack.c.bf16 %v844, %v843
        %v859 = vpack.c.bf16 %v846, %v845
        %v860 = vpack.c.bf16 %v848, %v847
        %v861 = vpack.c.bf16 %v850, %v849
        %v862 = vpack.c.bf16 %v852, %v851
        %v863 = vpack.c.bf16 %v854, %v853
        %v864 = vpack.c.bf16 %v856, %v855
        %865 = vmatprep.subr.bf16.mxu0 0
        %866 = vmatpush1.bf16.msra.mxu0 %v857
        %867 = vmatprep.subr.bf16.mxu0 0
        %868 = vmatpush1.bf16.msra.mxu0 %v858
        %869 = vmatprep.subr.bf16.mxu0 0
        %870 = vmatpush1.bf16.msra.mxu0 %v859
        %871 = vmatprep.subr.bf16.mxu0 0
        %872 = vmatpush1.bf16.msra.mxu0 %v860
        %873 = vmatprep.subr.bf16.mxu0 0
        %874 = vmatpush1.bf16.msra.mxu0 %v861
        %875 = vmatprep.subr.bf16.mxu0 0
        %876 = vmatpush1.bf16.msra.mxu0 %v862
        %877 = vmatprep.subr.bf16.mxu0 0
        %878 = vmatpush1.bf16.msra.mxu0 %v863
        %879 = vmatprep.subr.bf16.mxu0 0
        %880 = vmatpush1.bf16.msra.mxu0 %v864
        %881 = vmatprep.subr.bf16.mxu0 0
        %882 = vmatpush1.bf16.msra.mxu0 0
        %883 = vmatprep.subr.bf16.mxu0 0
        %884 = vmatpush1.bf16.msra.mxu0 0
        %885 = vmatprep.subr.bf16.mxu0 0
        %886 = vmatpush1.bf16.msra.mxu0 0
        %887 = vmatprep.subr.bf16.mxu0 0
        %888 = vmatpush1.bf16.msra.mxu0 0
        %889 = vmatprep.subr.bf16.mxu0 0
        %890 = vmatpush1.bf16.msra.mxu0 0
        %891 = vmatprep.subr.bf16.mxu0 0
        %892 = vmatpush1.bf16.msra.mxu0 0
        %893 = vmatprep.subr.bf16.mxu0 0
        %894 = vmatpush1.bf16.msra.mxu0 0
        %895 = vmatprep.subr.bf16.mxu0 0
        %896 = vmatpush1.bf16.msra.mxu0 0
        %897 = vmatprep.mubr.bf16.mxu0 0
        %898 = vmatmul.mubr.bf16.gmra.mrb[0].mxu0 %v598
        %v899 = vpop.f32.mrb[0].mxu0
        %v900 = vadd.f32 0.0, %v899
        %v901 = vpop.f32.mrb[0].mxu0
        %v902 = vpop.f32.mrb[0].mxu0
        %v903 = vpop.f32.mrb[0].mxu0
        %904 = vdwg.mxu0
        %v905 = vlaneseq
        %v906 = vand.u32 %v905, 127
        %vm907 = vcmp.lt.s32.totalorder %v906, 96
        %v908 = vadd.f32 %v339, %v900
        %v909 = vsel %vm907, %v908, 0.0
        %910 = vadd.xlane.f32.xlu0 %v909
        %v911 = vpop.xlane.xlu0 %910
        %v912 = vmul.f32 %v911, 0.010416667
        %v913 = vsub.f32 %v908, %v912
        %v914 = vsel %vm907, %v913, 0.0
        %v915 = vmul.f32 %v914, %v914
        %916 = vadd.xlane.f32.xlu0 %v915
        %v917 = vpop.xlane.xlu0 %916
        %v918 = vmul.f32 %v917, 0.010416667
        %v919 = vadd.f32 %v918, 1e-05
        %v920 = vrsqrt.pop %v919
        %v921 = vmul.f32 %v914, %v920
        %v922 = vlaneseq
        %v923 = vshrl.u32 %v922, 7
        %v924 = vsub.s32 3, %v923
        %v925 = vrot.slane %v341, %v924
        %v926 = vmul.f32 %v921, %v925
        %v927 = vlaneseq
        %v928 = vshrl.u32 %v927, 7
        %v929 = vsub.s32 4, %v928
        %v930 = vrot.slane %v341, %v929
        %v931 = vadd.f32 %v926, %v930
        %v932 = vpack.c.bf16 %v931, %v931
        %v933 = vld [vmem:[#allocation7] sm:$0xff]
        %v934 = vld [vmem:[#allocation7 + $0x8] sm:$0xff]
        %v935 = vld [vmem:[#allocation7 + $0x10] sm:$0xff]
        %v936 = vld [vmem:[#allocation7 + $0x18] sm:$0xff]
        %v937 = vld [vmem:[#allocation7 + $0x20] sm:$0xff]
        %v938 = vld [vmem:[#allocation7 + $0x28] sm:$0xff]
        %v939 = vld [vmem:[#allocation7 + $0x30] sm:$0xff]
        %v940 = vld [vmem:[#allocation7 + $0x38] sm:$0xff]
        %v941 = vld [vmem:[#allocation7 + $0x40] sm:$0xff]
        %v942 = vld [vmem:[#allocation7 + $0x48] sm:$0xff]
        %v943 = vld [vmem:[#allocation7 + $0x50] sm:$0xff]
        %v944 = vld [vmem:[#allocation7 + $0x58] sm:$0xff]
        %v945 = vld [vmem:[#allocation7 + $0x60] sm:$0xff]
        %v946 = vld [vmem:[#allocation7 + $0x68] sm:$0xff]
        %v947 = vld [vmem:[#allocation7 + $0x70] sm:$0xff]
        %v948 = vld [vmem:[#allocation7 + $0x78] sm:$0xff]
        %v949 = vld [vmem:[#allocation7 + $0x80] sm:$0xff]
        %v950 = vld [vmem:[#allocation7 + $0x88] sm:$0xff]
        %v951 = vld [vmem:[#allocation7 + $0x90] sm:$0xff]
        %v952 = vld [vmem:[#allocation7 + $0x98] sm:$0xff]
        %v953 = vld [vmem:[#allocation7 + $0xa0] sm:$0xff]
        %v954 = vld [vmem:[#allocation7 + $0xa8] sm:$0xff]
        %v955 = vld [vmem:[#allocation7 + $0xb0] sm:$0xff]
        %v956 = vld [vmem:[#allocation7 + $0xb8] sm:$0xff]
        %v957 = vld [vmem:[#allocation7 + $0xc0] sm:$0xff]
        %v958 = vld [vmem:[#allocation7 + $0xc8] sm:$0xff]
        %v959 = vld [vmem:[#allocation7 + $0xd0] sm:$0xff]
        %v960 = vld [vmem:[#allocation7 + $0xd8] sm:$0xff]
        %v961 = vld [vmem:[#allocation7 + $0xe0] sm:$0xff]
        %v962 = vld [vmem:[#allocation7 + $0xe8] sm:$0xff]
        %v963 = vld [vmem:[#allocation7 + $0xf0] sm:$0xff]
        %v964 = vld [vmem:[#allocation7 + $0xf8] sm:$0xff]
        %v965 = vlaneseq
        %v966 = vshrl.u32 %v965, 7
        %v967 = vsub.s32 1, %v966
        %v968 = vrot.slane %v341, %v967
        %v969 = vlaneseq
        %v970 = vshrl.u32 %v969, 7
        %v971 = vsub.s32 1, %v970
        %v972 = vrot.slane %v342, %v971
        %v973 = vlaneseq
        %v974 = vshrl.u32 %v973, 7
        %v975 = vsub.s32 1, %v974
        %v976 = vrot.slane %v343, %v975
        %v977 = vlaneseq
        %v978 = vshrl.u32 %v977, 7
        %v979 = vsub.s32 1, %v978
        %v980 = vrot.slane %v344, %v979
        %v1013 = vunpack.c.l.b16 %v933
        %v1014 = vunpack.c.h.b16 %v933
        %v1015 = vunpack.c.l.b16 %v934
        %v1016 = vunpack.c.h.b16 %v934
        %v1017 = vunpack.c.l.b16 %v935
        %v1018 = vunpack.c.h.b16 %v935
        %v1019 = vunpack.c.l.b16 %v936
        %v1020 = vunpack.c.h.b16 %v936
        %v1021 = vunpack.c.l.b16 %v937
        %v1022 = vunpack.c.h.b16 %v937
        %v1023 = vunpack.c.l.b16 %v938
        %v1024 = vunpack.c.h.b16 %v938
        %v1025 = vunpack.c.l.b16 %v939
        %v1026 = vunpack.c.h.b16 %v939
        %v1027 = vunpack.c.l.b16 %v940
        %v1028 = vunpack.c.h.b16 %v940
        %v1029 = vunpack.c.l.b16 %v941
        %v1030 = vunpack.c.h.b16 %v941
        %v1031 = vunpack.c.l.b16 %v942
        %v1032 = vunpack.c.h.b16 %v942
        %v1033 = vunpack.c.l.b16 %v943
        %v1034 = vunpack.c.h.b16 %v943
        %v1035 = vunpack.c.l.b16 %v944
        %v1036 = vunpack.c.h.b16 %v944
        %v1037 = vunpack.c.l.b16 %v945
        %v1038 = vunpack.c.h.b16 %v945
        %v1039 = vunpack.c.l.b16 %v946
        %v1040 = vunpack.c.h.b16 %v946
        %v1041 = vunpack.c.l.b16 %v947
        %v1042 = vunpack.c.h.b16 %v947
        %v1043 = vunpack.c.l.b16 %v948
        %v1044 = vunpack.c.h.b16 %v948
        %v1045 = vunpack.c.l.b16 %v949
        %v1046 = vunpack.c.h.b16 %v949
        %v1047 = vunpack.c.l.b16 %v950
        %v1048 = vunpack.c.h.b16 %v950
        %v1049 = vunpack.c.l.b16 %v951
        %v1050 = vunpack.c.h.b16 %v951
        %v1051 = vunpack.c.l.b16 %v952
        %v1052 = vunpack.c.h.b16 %v952
        %v1053 = vunpack.c.l.b16 %v953
        %v1054 = vunpack.c.h.b16 %v953
        %v1055 = vunpack.c.l.b16 %v954
        %v1056 = vunpack.c.h.b16 %v954
        %v1057 = vunpack.c.l.b16 %v955
        %v1058 = vunpack.c.h.b16 %v955
        %v1059 = vunpack.c.l.b16 %v956
        %v1060 = vunpack.c.h.b16 %v956
        %v1061 = vunpack.c.l.b16 %v957
        %v1062 = vunpack.c.h.b16 %v957
        %v1063 = vunpack.c.l.b16 %v958
        %v1064 = vunpack.c.h.b16 %v958
        %v1065 = vunpack.c.l.b16 %v959
        %v1066 = vunpack.c.h.b16 %v959
        %v1067 = vunpack.c.l.b16 %v960
        %v1068 = vunpack.c.h.b16 %v960
        %v1069 = vunpack.c.l.b16 %v961
        %v1070 = vunpack.c.h.b16 %v961
        %v1071 = vunpack.c.l.b16 %v962
        %v1072 = vunpack.c.h.b16 %v962
        %v1073 = vunpack.c.l.b16 %v963
        %v1074 = vunpack.c.h.b16 %v963
        %v1075 = vunpack.c.l.b16 %v964
        %v1076 = vunpack.c.h.b16 %v964
        %v1077 = vpack.c.b16 %v1017, %v1013
        %v1078 = vpack.c.b16 %v1018, %v1014
        %v1079 = vpack.c.b16 %v1019, %v1015
        %v1080 = vpack.c.b16 %v1020, %v1016
        %v1081 = vpack.c.b16 %v1025, %v1021
        %v1082 = vpack.c.b16 %v1026, %v1022
        %v1083 = vpack.c.b16 %v1027, %v1023
        %v1084 = vpack.c.b16 %v1028, %v1024
        %v1085 = vpack.c.b16 %v1033, %v1029
        %v1086 = vpack.c.b16 %v1034, %v1030
        %v1087 = vpack.c.b16 %v1035, %v1031
        %v1088 = vpack.c.b16 %v1036, %v1032
        %v1089 = vpack.c.b16 %v1041, %v1037
        %v1090 = vpack.c.b16 %v1042, %v1038
        %v1091 = vpack.c.b16 %v1043, %v1039
        %v1092 = vpack.c.b16 %v1044, %v1040
        %v1093 = vpack.c.b16 %v1049, %v1045
        %v1094 = vpack.c.b16 %v1050, %v1046
        %v1095 = vpack.c.b16 %v1051, %v1047
        %v1096 = vpack.c.b16 %v1052, %v1048
        %v1097 = vpack.c.b16 %v1057, %v1053
        %v1098 = vpack.c.b16 %v1058, %v1054
        %v1099 = vpack.c.b16 %v1059, %v1055
        %v1100 = vpack.c.b16 %v1060, %v1056
        %v1101 = vpack.c.b16 %v1065, %v1061
        %v1102 = vpack.c.b16 %v1066, %v1062
        %v1103 = vpack.c.b16 %v1067, %v1063
        %v1104 = vpack.c.b16 %v1068, %v1064
        %v1105 = vpack.c.b16 %v1073, %v1069
        %v1106 = vpack.c.b16 %v1074, %v1070
        %v1107 = vpack.c.b16 %v1075, %v1071
        %v1108 = vpack.c.b16 %v1076, %v1072
        %1141 = vmatprep.subr.bf16.mxu0 %v1078
        %1142 = vmatpush1.bf16.msra.mxu0 %v1077
        %1143 = vmatprep.subr.bf16.mxu0 %v1082
        %1144 = vmatpush1.bf16.msra.mxu0 %v1081
        %1145 = vmatprep.subr.bf16.mxu0 %v1086
        %1146 = vmatpush1.bf16.msra.mxu0 %v1085
        %1147 = vmatprep.subr.bf16.mxu0 %v1090
        %1148 = vmatpush1.bf16.msra.mxu0 %v1089
        %1149 = vmatprep.subr.bf16.mxu0 %v1094
        %1150 = vmatpush1.bf16.msra.mxu0 %v1093
        %1151 = vmatprep.subr.bf16.mxu0 %v1098
        %1152 = vmatpush1.bf16.msra.mxu0 %v1097
        %1153 = vmatprep.subr.bf16.mxu0 %v1102
        %1154 = vmatpush1.bf16.msra.mxu0 %v1101
        %1155 = vmatprep.subr.bf16.mxu0 %v1106
        %1156 = vmatpush1.bf16.msra.mxu0 %v1105
        %1157 = vmatprep.subr.bf16.mxu0 0
        %1158 = vmatpush1.bf16.msra.mxu0 0
        %1159 = vmatprep.subr.bf16.mxu0 0
        %1160 = vmatpush1.bf16.msra.mxu0 0
        %1161 = vmatprep.subr.bf16.mxu0 0
        %1162 = vmatpush1.bf16.msra.mxu0 0
        %1163 = vmatprep.subr.bf16.mxu0 0
        %1164 = vmatpush1.bf16.msra.mxu0 0
        %1165 = vmatprep.subr.bf16.mxu0 0
        %1166 = vmatpush1.bf16.msra.mxu0 0
        %1167 = vmatprep.subr.bf16.mxu0 0
        %1168 = vmatpush1.bf16.msra.mxu0 0
        %1169 = vmatprep.subr.bf16.mxu0 0
        %1170 = vmatpush1.bf16.msra.mxu0 0
        %1171 = vmatprep.subr.bf16.mxu0 0
        %1172 = vmatpush1.bf16.msra.mxu0 0
        %1173 = vmatprep.mubr.bf16.mxu0 0
        %1174 = vmatmul.mubr.bf16.gmra.mrb[0].mxu0 %v932
        %v1175 = vpop.f32.mrb[0].mxu0
        %v1176 = vadd.f32 %v968, %v1175
        %v1177 = vpop.f32.mrb[0].mxu0
        %v1178 = vadd.f32 %v972, %v1177
        %v1179 = vpop.f32.mrb[0].mxu0
        %v1180 = vpop.f32.mrb[0].mxu0
        %1181 = vdwg.mxu0
        %1182 = vmatprep.subr.bf16.mxu0 %v1080
        %1183 = vmatpush1.bf16.msra.mxu0 %v1079
        %1184 = vmatprep.subr.bf16.mxu0 %v1084
        %1185 = vmatpush1.bf16.msra.mxu0 %v1083
        %1186 = vmatprep.subr.bf16.mxu0 %v1088
        %1187 = vmatpush1.bf16.msra.mxu0 %v1087
        %1188 = vmatprep.subr.bf16.mxu0 %v1092
        %1189 = vmatpush1.bf16.msra.mxu0 %v1091
        %1190 = vmatprep.subr.bf16.mxu0 %v1096
        %1191 = vmatpush1.bf16.msra.mxu0 %v1095
        %1192 = vmatprep.subr.bf16.mxu0 %v1100
        %1193 = vmatpush1.bf16.msra.mxu0 %v1099
        %1194 = vmatprep.subr.bf16.mxu0 %v1104
        %1195 = vmatpush1.bf16.msra.mxu0 %v1103
        %1196 = vmatprep.subr.bf16.mxu0 %v1108
        %1197 = vmatpush1.bf16.msra.mxu0 %v1107
        %1198 = vmatprep.subr.bf16.mxu0 0
        %1199 = vmatpush1.bf16.msra.mxu0 0
        %1200 = vmatprep.subr.bf16.mxu0 0
        %1201 = vmatpush1.bf16.msra.mxu0 0
        %1202 = vmatprep.subr.bf16.mxu0 0
        %1203 = vmatpush1.bf16.msra.mxu0 0
        %1204 = vmatprep.subr.bf16.mxu0 0
        %1205 = vmatpush1.bf16.msra.mxu0 0
        %1206 = vmatprep.subr.bf16.mxu0 0
        %1207 = vmatpush1.bf16.msra.mxu0 0
        %1208 = vmatprep.subr.bf16.mxu0 0
        %1209 = vmatpush1.bf16.msra.mxu0 0
        %1210 = vmatprep.subr.bf16.mxu0 0
        %1211 = vmatpush1.bf16.msra.mxu0 0
        %1212 = vmatprep.subr.bf16.mxu0 0
        %1213 = vmatpush1.bf16.msra.mxu0 0
        %1214 = vmatprep.mubr.bf16.mxu0 0
        %1215 = vmatmul.mubr.bf16.gmra.mrb[0].mxu0 %v932
        %v1216 = vpop.f32.mrb[0].mxu0
        %v1217 = vadd.f32 %v976, %v1216
        %v1218 = vpop.f32.mrb[0].mxu0
        %v1219 = vadd.f32 %v980, %v1218
        %v1220 = vpop.f32.mrb[0].mxu0
        %v1221 = vpop.f32.mrb[0].mxu0
        %1222 = vdwg.mxu0
        %v1223 = vmax.f32 %v1176, 0.0
        %v1224 = vmax.f32 %v1178, 0.0
        %v1225 = vmax.f32 %v1217, 0.0
        %v1226 = vmax.f32 %v1219, 0.0
        %v1227 = vpack.c.bf16 %v1223, %v1223
        %v1228 = vpack.c.bf16 %v1224, %v1224
        %v1229 = vpack.c.bf16 %v1225, %v1225
        %v1230 = vpack.c.bf16 %v1226, %v1226
        %v1231 = vld [vmem:[#allocation8] sm:$0xf]
        %v1232 = vld [vmem:[#allocation8 + $0x4] sm:$0xf]
        %v1233 = vld [vmem:[#allocation8 + $0x8] sm:$0xf]
        %v1234 = vld [vmem:[#allocation8 + $0xc] sm:$0xf]
        %v1235 = vld [vmem:[#allocation8 + $0x10] sm:$0xf]
        %v1236 = vld [vmem:[#allocation8 + $0x14] sm:$0xf]
        %v1237 = vld [vmem:[#allocation8 + $0x18] sm:$0xf]
        %v1238 = vld [vmem:[#allocation8 + $0x1c] sm:$0xf]
        %v1239 = vld [vmem:[#allocation8 + $0x20] sm:$0xf]
        %v1240 = vld [vmem:[#allocation8 + $0x24] sm:$0xf]
        %v1241 = vld [vmem:[#allocation8 + $0x28] sm:$0xf]
        %v1242 = vld [vmem:[#allocation8 + $0x2c] sm:$0xf]
        %v1243 = vld [vmem:[#allocation8 + $0x30] sm:$0xf]
        %v1244 = vld [vmem:[#allocation8 + $0x34] sm:$0xf]
        %v1245 = vld [vmem:[#allocation8 + $0x38] sm:$0xf]
        %v1246 = vld [vmem:[#allocation8 + $0x3c] sm:$0xf]
        %v1247 = vld [vmem:[#allocation8 + $0x40] sm:$0xf]
        %v1248 = vld [vmem:[#allocation8 + $0x44] sm:$0xf]
        %v1249 = vld [vmem:[#allocation8 + $0x48] sm:$0xf]
        %v1250 = vld [vmem:[#allocation8 + $0x4c] sm:$0xf]
        %v1251 = vld [vmem:[#allocation8 + $0x50] sm:$0xf]
        %v1252 = vld [vmem:[#allocation8 + $0x54] sm:$0xf]
        %v1253 = vld [vmem:[#allocation8 + $0x58] sm:$0xf]
        %v1254 = vld [vmem:[#allocation8 + $0x5c] sm:$0xf]
        %v1255 = vld [vmem:[#allocation8 + $0x60] sm:$0xf]
        %v1256 = vld [vmem:[#allocation8 + $0x64] sm:$0xf]
        %v1257 = vld [vmem:[#allocation8 + $0x68] sm:$0xf]
        %v1258 = vld [vmem:[#allocation8 + $0x6c] sm:$0xf]
        %v1259 = vld [vmem:[#allocation8 + $0x70] sm:$0xf]
        %v1260 = vld [vmem:[#allocation8 + $0x74] sm:$0xf]
        %v1261 = vld [vmem:[#allocation8 + $0x78] sm:$0xf]
        %v1262 = vld [vmem:[#allocation8 + $0x7c] sm:$0xf]
        %v1263 = vld [vmem:[#allocation8 + $0x80] sm:$0xf]
        %v1264 = vld [vmem:[#allocation8 + $0x84] sm:$0xf]
        %v1265 = vld [vmem:[#allocation8 + $0x88] sm:$0xf]
        %v1266 = vld [vmem:[#allocation8 + $0x8c] sm:$0xf]
        %v1267 = vld [vmem:[#allocation8 + $0x90] sm:$0xf]
        %v1268 = vld [vmem:[#allocation8 + $0x94] sm:$0xf]
        %v1269 = vld [vmem:[#allocation8 + $0x98] sm:$0xf]
        %v1270 = vld [vmem:[#allocation8 + $0x9c] sm:$0xf]
        %v1271 = vld [vmem:[#allocation8 + $0xa0] sm:$0xf]
        %v1272 = vld [vmem:[#allocation8 + $0xa4] sm:$0xf]
        %v1273 = vld [vmem:[#allocation8 + $0xa8] sm:$0xf]
        %v1274 = vld [vmem:[#allocation8 + $0xac] sm:$0xf]
        %v1275 = vld [vmem:[#allocation8 + $0xb0] sm:$0xf]
        %v1276 = vld [vmem:[#allocation8 + $0xb4] sm:$0xf]
        %v1277 = vld [vmem:[#allocation8 + $0xb8] sm:$0xf]
        %v1278 = vld [vmem:[#allocation8 + $0xbc] sm:$0xf]
        %v1279 = vld [vmem:[#allocation8 + $0xc0] sm:$0xf]
        %v1280 = vld [vmem:[#allocation8 + $0xc4] sm:$0xf]
        %v1281 = vld [vmem:[#allocation8 + $0xc8] sm:$0xf]
        %v1282 = vld [vmem:[#allocation8 + $0xcc] sm:$0xf]
        %v1283 = vld [vmem:[#allocation8 + $0xd0] sm:$0xf]
        %v1284 = vld [vmem:[#allocation8 + $0xd4] sm:$0xf]
        %v1285 = vld [vmem:[#allocation8 + $0xd8] sm:$0xf]
        %v1286 = vld [vmem:[#allocation8 + $0xdc] sm:$0xf]
        %v1287 = vld [vmem:[#allocation8 + $0xe0] sm:$0xf]
        %v1288 = vld [vmem:[#allocation8 + $0xe4] sm:$0xf]
        %v1289 = vld [vmem:[#allocation8 + $0xe8] sm:$0xf]
        %v1290 = vld [vmem:[#allocation8 + $0xec] sm:$0xf]
        %v1291 = vld [vmem:[#allocation8 + $0xf0] sm:$0xf]
        %v1292 = vld [vmem:[#allocation8 + $0xf4] sm:$0xf]
        %v1293 = vld [vmem:[#allocation8 + $0xf8] sm:$0xf]
        %v1294 = vld [vmem:[#allocation8 + $0xfc] sm:$0xf]
        %v1295 = vlaneseq
        %v1296 = vshrl.u32 %v1295, 7
        %v1297 = vsub.s32 2, %v1296
        %v1298 = vrot.slane %v341, %v1297
        %v1363 = vunpack.c.l.b16 %v1231
        %v1364 = vunpack.c.l.b16 %v1232
        %v1365 = vunpack.c.l.b16 %v1233
        %v1366 = vunpack.c.l.b16 %v1234
        %v1367 = vunpack.c.l.b16 %v1235
        %v1368 = vunpack.c.l.b16 %v1236
        %v1369 = vunpack.c.l.b16 %v1237
        %v1370 = vunpack.c.l.b16 %v1238
        %v1371 = vunpack.c.l.b16 %v1239
        %v1372 = vunpack.c.l.b16 %v1240
        %v1373 = vunpack.c.l.b16 %v1241
        %v1374 = vunpack.c.l.b16 %v1242
        %v1375 = vunpack.c.l.b16 %v1243
        %v1376 = vunpack.c.l.b16 %v1244
        %v1377 = vunpack.c.l.b16 %v1245
        %v1378 = vunpack.c.l.b16 %v1246
        %v1379 = vunpack.c.l.b16 %v1247
        %v1380 = vunpack.c.l.b16 %v1248
        %v1381 = vunpack.c.l.b16 %v1249
        %v1382 = vunpack.c.l.b16 %v1250
        %v1383 = vunpack.c.l.b16 %v1251
        %v1384 = vunpack.c.l.b16 %v1252
        %v1385 = vunpack.c.l.b16 %v1253
        %v1386 = vunpack.c.l.b16 %v1254
        %v1387 = vunpack.c.l.b16 %v1255
        %v1388 = vunpack.c.l.b16 %v1256
        %v1389 = vunpack.c.l.b16 %v1257
        %v1390 = vunpack.c.l.b16 %v1258
        %v1391 = vunpack.c.l.b16 %v1259
        %v1392 = vunpack.c.l.b16 %v1260
        %v1393 = vunpack.c.l.b16 %v1261
        %v1394 = vunpack.c.l.b16 %v1262
        %v1395 = vunpack.c.l.b16 %v1263
        %v1396 = vunpack.c.l.b16 %v1264
        %v1397 = vunpack.c.l.b16 %v1265
        %v1398 = vunpack.c.l.b16 %v1266
        %v1399 = vunpack.c.l.b16 %v1267
        %v1400 = vunpack.c.l.b16 %v1268
        %v1401 = vunpack.c.l.b16 %v1269
        %v1402 = vunpack.c.l.b16 %v1270
        %v1403 = vunpack.c.l.b16 %v1271
        %v1404 = vunpack.c.l.b16 %v1272
        %v1405 = vunpack.c.l.b16 %v1273
        %v1406 = vunpack.c.l.b16 %v1274
        %v1407 = vunpack.c.l.b16 %v1275
        %v1408 = vunpack.c.l.b16 %v1276
        %v1409 = vunpack.c.l.b16 %v1277
        %v1410 = vunpack.c.l.b16 %v1278
        %v1411 = vunpack.c.l.b16 %v1279
        %v1412 = vunpack.c.l.b16 %v1280
        %v1413 = vunpack.c.l.b16 %v1281
        %v1414 = vunpack.c.l.b16 %v1282
        %v1415 = vunpack.c.l.b16 %v1283
        %v1416 = vunpack.c.l.b16 %v1284
        %v1417 = vunpack.c.l.b16 %v1285
        %v1418 = vunpack.c.l.b16 %v1286
        %v1419 = vunpack.c.l.b16 %v1287
        %v1420 = vunpack.c.l.b16 %v1288
        %v1421 = vunpack.c.l.b16 %v1289
        %v1422 = vunpack.c.l.b16 %v1290
        %v1423 = vunpack.c.l.b16 %v1291
        %v1424 = vunpack.c.l.b16 %v1292
        %v1425 = vunpack.c.l.b16 %v1293
        %v1426 = vunpack.c.l.b16 %v1294
        %v1427 = vpack.c.b16 %v1364, %v1363
        %v1428 = vpack.c.b16 %v1366, %v1365
        %v1429 = vpack.c.b16 %v1368, %v1367
        %v1430 = vpack.c.b16 %v1370, %v1369
        %v1431 = vpack.c.b16 %v1372, %v1371
        %v1432 = vpack.c.b16 %v1374, %v1373
        %v1433 = vpack.c.b16 %v1376, %v1375
        %v1434 = vpack.c.b16 %v1378, %v1377
        %v1435 = vpack.c.b16 %v1380, %v1379
        %v1436 = vpack.c.b16 %v1382, %v1381
        %v1437 = vpack.c.b16 %v1384, %v1383
        %v1438 = vpack.c.b16 %v1386, %v1385
        %v1439 = vpack.c.b16 %v1388, %v1387
        %v1440 = vpack.c.b16 %v1390, %v1389
        %v1441 = vpack.c.b16 %v1392, %v1391
        %v1442 = vpack.c.b16 %v1394, %v1393
        %v1443 = vpack.c.b16 %v1396, %v1395
        %v1444 = vpack.c.b16 %v1398, %v1397
        %v1445 = vpack.c.b16 %v1400, %v1399
        %v1446 = vpack.c.b16 %v1402, %v1401
        %v1447 = vpack.c.b16 %v1404, %v1403
        %v1448 = vpack.c.b16 %v1406, %v1405
        %v1449 = vpack.c.b16 %v1408, %v1407
        %v1450 = vpack.c.b16 %v1410, %v1409
        %v1451 = vpack.c.b16 %v1412, %v1411
        %v1452 = vpack.c.b16 %v1414, %v1413
        %v1453 = vpack.c.b16 %v1416, %v1415
        %v1454 = vpack.c.b16 %v1418, %v1417
        %v1455 = vpack.c.b16 %v1420, %v1419
        %v1456 = vpack.c.b16 %v1422, %v1421
        %v1457 = vpack.c.b16 %v1424, %v1423
        %v1458 = vpack.c.b16 %v1426, %v1425
        %1491 = vmatprep.subr.bf16.mxu0 0
        %1492 = vmatpush1.bf16.msra.mxu0 %v1427
        %1493 = vmatprep.subr.bf16.mxu0 0
        %1494 = vmatpush1.bf16.msra.mxu0 %v1428
        %1495 = vmatprep.subr.bf16.mxu0 0
        %1496 = vmatpush1.bf16.msra.mxu0 %v1429
        %1497 = vmatprep.subr.bf16.mxu0 0
        %1498 = vmatpush1.bf16.msra.mxu0 %v1430
        %1499 = vmatprep.subr.bf16.mxu0 0
        %1500 = vmatpush1.bf16.msra.mxu0 %v1431
        %1501 = vmatprep.subr.bf16.mxu0 0
        %1502 = vmatpush1.bf16.msra.mxu0 %v1432
        %1503 = vmatprep.subr.bf16.mxu0 0
        %1504 = vmatpush1.bf16.msra.mxu0 %v1433
        %1505 = vmatprep.subr.bf16.mxu0 0
        %1506 = vmatpush1.bf16.msra.mxu0 %v1434
        %1507 = vmatprep.subr.bf16.mxu0 0
        %1508 = vmatpush1.bf16.msra.mxu0 %v1435
        %1509 = vmatprep.subr.bf16.mxu0 0
        %1510 = vmatpush1.bf16.msra.mxu0 %v1436
        %1511 = vmatprep.subr.bf16.mxu0 0
        %1512 = vmatpush1.bf16.msra.mxu0 %v1437
        %1513 = vmatprep.subr.bf16.mxu0 0
        %1514 = vmatpush1.bf16.msra.mxu0 %v1438
        %1515 = vmatprep.subr.bf16.mxu0 0
        %1516 = vmatpush1.bf16.msra.mxu0 %v1439
        %1517 = vmatprep.subr.bf16.mxu0 0
        %1518 = vmatpush1.bf16.msra.mxu0 %v1440
        %1519 = vmatprep.subr.bf16.mxu0 0
        %1520 = vmatpush1.bf16.msra.mxu0 %v1441
        %1521 = vmatprep.subr.bf16.mxu0 0
        %1522 = vmatpush1.bf16.msra.mxu0 %v1442
        %1523 = vmatprep.mubr.bf16.mxu0 %v1228
        %1524 = vmatmul.mubr.bf16.gmra.mrb[0].mxu0 %v1227
        %v1525 = vpop.f32.mrb[0].mxu0
        %v1526 = vadd.f32 %v1298, %v1525
        %v1527 = vpop.f32.mrb[0].mxu0
        %v1528 = vpop.f32.mrb[0].mxu0
        %v1529 = vpop.f32.mrb[0].mxu0
        %1530 = vdwg.mxu0
        %1531 = vmatprep.subr.bf16.mxu0 0
        %1532 = vmatpush1.bf16.msra.mxu0 %v1443
        %1533 = vmatprep.subr.bf16.mxu0 0
        %1534 = vmatpush1.bf16.msra.mxu0 %v1444
        %1535 = vmatprep.subr.bf16.mxu0 0
        %1536 = vmatpush1.bf16.msra.mxu0 %v1445
        %1537 = vmatprep.subr.bf16.mxu0 0
        %1538 = vmatpush1.bf16.msra.mxu0 %v1446
        %1539 = vmatprep.subr.bf16.mxu0 0
        %1540 = vmatpush1.bf16.msra.mxu0 %v1447
        %1541 = vmatprep.subr.bf16.mxu0 0
        %1542 = vmatpush1.bf16.msra.mxu0 %v1448
        %1543 = vmatprep.subr.bf16.mxu0 0
        %1544 = vmatpush1.bf16.msra.mxu0 %v1449
        %1545 = vmatprep.subr.bf16.mxu0 0
        %1546 = vmatpush1.bf16.msra.mxu0 %v1450
        %1547 = vmatprep.subr.bf16.mxu0 0
        %1548 = vmatpush1.bf16.msra.mxu0 %v1451
        %1549 = vmatprep.subr.bf16.mxu0 0
        %1550 = vmatpush1.bf16.msra.mxu0 %v1452
        %1551 = vmatprep.subr.bf16.mxu0 0
        %1552 = vmatpush1.bf16.msra.mxu0 %v1453
        %1553 = vmatprep.subr.bf16.mxu0 0
        %1554 = vmatpush1.bf16.msra.mxu0 %v1454
        %1555 = vmatprep.subr.bf16.mxu0 0
        %1556 = vmatpush1.bf16.msra.mxu0 %v1455
        %1557 = vmatprep.subr.bf16.mxu0 0
        %1558 = vmatpush1.bf16.msra.mxu0 %v1456
        %1559 = vmatprep.subr.bf16.mxu0 0
        %1560 = vmatpush1.bf16.msra.mxu0 %v1457
        %1561 = vmatprep.subr.bf16.mxu0 0
        %1562 = vmatpush1.bf16.msra.mxu0 %v1458
        %1563 = vmatprep.mubr.bf16.mxu0 %v1230
        %1564 = vmatmul.mubr.bf16.gmra.mrb[0].mxu0 %v1229
        %v1565 = vpop.f32.mrb[0].mxu0
        %v1566 = vadd.f32 %v1526, %v1565
        %v1567 = vpop.f32.mrb[0].mxu0
        %v1568 = vpop.f32.mrb[0].mxu0
        %v1569 = vpop.f32.mrb[0].mxu0
        %1570 = vdwg.mxu0
        %v1571 = vadd.f32 %v931, %v1566
        %v1572 = vsel %vm907, %v1571, 0.0
        %1573 = vadd.xlane.f32.xlu0 %v1572
        %v1574 = vpop.xlane.xlu0 %1573
        %v1575 = vmul.f32 %v1574, 0.010416667
        %v1576 = vsub.f32 %v1571, %v1575
        %v1577 = vsel %vm907, %v1576, 0.0
        %v1578 = vmul.f32 %v1577, %v1577
        %1579 = vadd.xlane.f32.xlu0 %v1578
        %v1580 = vpop.xlane.xlu0 %1579
        %v1581 = vmul.f32 %v1580, 0.010416667
        %v1582 = vadd.f32 %v1581, 1e-05
        %v1583 = vrsqrt.pop %v1582
        %v1584 = vmul.f32 %v1577, %v1583
        %v1585 = vlaneseq
        %v1586 = vshrl.u32 %v1585, 7
        %v1587 = vsub.s32 5, %v1586
        %v1588 = vrot.slane %v341, %v1587
        %v1589 = vmul.f32 %v1584, %v1588
        %v1590 = vlaneseq
        %v1591 = vshrl.u32 %v1590, 7
        %v1592 = vsub.s32 6, %v1591
        %v1593 = vrot.slane %v341, %v1592
        %v1594 = vadd.f32 %v1589, %v1593
        %1595 = vst [vmem:[%s337] sm:$0xff] %v1594
        %s1596 = sand.u32 %s165, 1
        %s1597 = scalar_lea.sflag [#allocation4], %s1596
        %s1598 = sand.u32 %s165, 1
        %s1599 = smul.addr %s1598, 8
        %s1600 = scalar_lea.vmem [#allocation13], %s1599
        // Predicated region
        $region69: #{tpu_custom_call.1} parent=43 // pred_check
          %p1601 = pneg %p175
        $region70: #{tpu_custom_call.1} parent=43 // pred_check_branch
          %1603 = sbr.rel (%p1601) target = $region72
        $region71: #{tpu_custom_call.1} parent=43 // pred_region
          %s1605 = ssub.s32 128, 128
          %1606 = vsyncadd %s1597, %s1605
          %s1607 = smul.addr %s26, 128
          %s1608 = scalar_lea.hbm %s6, %s1607
          %s1610 = sshll.u32 %s1600, 4
          %s1611 = int_to_ptr.vmem [resolvable:$true] %s1610
          %1613 = dma.vmem_to_hbm [thread:$0]  %s1611, 128, %s1608, %s1597
        $region72: #{tpu_custom_call.1} parent=43 // pred_fallthru
          _
      $region44: #{tpu_custom_call.1} parent=5 // pred_fallthru
        _
      %p1614 = scmp.le.s32.totalorder 2, %s21
      // Predicated region
      $region73: #{tpu_custom_call.1} parent=5 // pred_check
        %p1615 = pneg %p1614
      $region74: #{tpu_custom_call.1} parent=5 // pred_check_branch
        %1617 = sbr.rel (%p1615) target = $region76
      $region75: #{tpu_custom_call.1} parent=5 // pred_region
        %s1618 = ssub.s32 %s21, 2
        // Predicated region
        $region77: #{tpu_custom_call.1} parent=75 // pred_check
          %p1619 = pneg %p181
        $region78: #{tpu_custom_call.1} parent=75 // pred_check_branch
          %1621 = sbr.rel (%p1619) target = $region80
        $region79: #{tpu_custom_call.1} parent=75 // pred_region
          %s1622 = sand.u32 %s166, 1
          %s1623 = scalar_lea.sflag [#allocation4], %s1622
          %s1624 = sand.u32 %s166, 1
          %s1625 = smul.addr %s1624, 8
          %s1626 = scalar_lea.vmem [#allocation13], %s1625
          %1627 = dma.done %s1623, 128
        $region80: #{tpu_custom_call.1} parent=75 // pred_fallthru
          _
      $region76: #{tpu_custom_call.1} parent=5 // pred_fallthru
        _
    $region6: #{tpu_custom_call.1} parent=1 // loop_footer
      %s25 = sadd.s32 1, %s21
    $region7: #{tpu_custom_call.1} parent=1 // loop_footer_branch
      %20 = sbr.rel target = $region3
    $region8: #{tpu_custom_call.1} parent=1 // loop_exit
      _
    %1628 = vsyncpa [#allocation3], 1
    %s1629 = scalar_lea.sflag [#allocation3], 1
    %1630 = vsyncpa %s1629, 1
    %1631 = vsyncpa [#allocation6], 1
    %1632 = vsyncpa [#allocation9], 1
    %1633 = vsyncpa [#allocation12], 1
    %1634 = vsyncpa [#allocation4], 1
    %s1635 = scalar_lea.sflag [#allocation4], 1
    %1636 = vsyncpa %s1635, 1

</llo_original>
